<compile_context>
chip_gen: v7x
topology: tpu7x:2x2x1
jax: 0.10.0
libtpu: 0.0.40
codegen_flags: <defaults>
</compile_context>

<pallas_src>
import jax
import jax.numpy as jnp
from jax.experimental import pallas as pl
from jax.experimental.pallas import tpu as pltpu

LEAKY_SLOPE = 0.01  # F.leaky_relu default negative_slope
HIDDEN = (1024, 512, 256, 128)


def _round_up(x, m):
    return (x + m - 1) // m * m


def _cdiv(a, b):
    return -(-a // b)


def _leaky_relu(x):
    # max-form leaky: mul + max (2 VALU ops) instead of cmp + mul + select.
    return jnp.maximum(x, LEAKY_SLOPE * x)


def critic_kernel(x_ref,
                  w1_ref, b1_ref,
                  w2_ref, b2_ref,
                  w3_ref, b3_ref,
                  w4_ref, b4_ref,
                  w5_ref, b5_ref,
                  out_ref):
    # Layers 1-3: bf16 MXU matmul with f32 accumulation, f32 bias add, then
    # cast to bf16 *before* the leaky so the elementwise work is packed bf16
    # on v6e/v7x; the following matmul consumes bf16 anyway.
    h = x_ref[...]                                             # bf16 (tb, din)
    for w_ref, b_ref in ((w1_ref, b1_ref),
                         (w2_ref, b2_ref),
                         (w3_ref, b3_ref)):
        z = (jnp.dot(h, w_ref[...], preferred_element_type=jnp.float32)
             + b_ref[...])
        h = _leaky_relu(z.astype(jnp.bfloat16))

    # Layer 4 stays f32: its output feeds the f32 VPU reduction head.
    z4 = (jnp.dot(h, w4_ref[...], preferred_element_type=jnp.float32)
          + b4_ref[...])
    h4 = _leaky_relu(z4)                                       # f32 (tb, 128)

    # Final (128 -> 1) layer: VPU multiply + lane reduction instead of an
    # N=1 MXU matmul with masked 1-lane result stores.
    w5 = w5_ref[...].astype(jnp.float32)                       # (1, 128)
    q = jnp.sum(h4 * w5, axis=-1, keepdims=True) + b5_ref[...]
    out_ref[...] = q.astype(out_ref.dtype)


def make_critic_params(key, state_dim, action_dim):
    """Init matching the torch module: weights ~ N(0, 0.01), bias = 0.

    Weights are stored (in_features, out_features) in bf16 (f32 accumulation in
    the kernel); W5 is stored as a (1, 128) row for the VPU reduction head.
    """
    dims = [state_dim + action_dim] + list(HIDDEN) + [1]
    keys = jax.random.split(key, len(dims) - 1)
    ws, bs = [], []
    for k, (din, dout) in zip(keys, zip(dims[:-1], dims[1:])):
        w = 0.01 * jax.random.normal(k, (din, dout), dtype=jnp.float32)
        ws.append(w.astype(jnp.bfloat16))
        bs.append(jnp.zeros((1, dout), dtype=jnp.float32))
    return {
        "w1": ws[0], "b1": bs[0],
        "w2": ws[1], "b2": bs[1],
        "w3": ws[2], "b3": bs[2],
        "w4": ws[3], "b4": bs[3],
        "w5_row": ws[4].T,                         # (1, 128)
        "b5": bs[4],                               # (1, 1)
    }


def critics_forward(state, action, params, *, block_b=512):
    """state: (B, state_dim), action: (B, action_dim) -> (B, 1) f32."""
    B = state.shape[0]

    # Fused concat in the wrapper; inputs travel as bf16 (half the DMA bytes,
    # no in-kernel input casts).
    x = jnp.concatenate([state, action], axis=1).astype(jnp.bfloat16)
    din = x.shape[1]

    # Tile selection:
    #   * at most block_b rows per tile (VMEM budget),
    #   * minimal padding for awkward B,
    #   * >= 2 grid steps when B allows it so the "parallel" batch axis can
    #     shard across both v7x TensorCores.
    n_tiles = max(1, _cdiv(B, block_b))
    if n_tiles == 1 and B >= 16:
        n_tiles = 2
    tb = _round_up(_cdiv(B, n_tiles), 8)           # f32/bf16 sublane multiple
    b_pad = tb * n_tiles
    if b_pad != B:
        x = jnp.pad(x, ((0, b_pad - B), (0, 0)))

    weight_args = [
        params["w1"], params["b1"],
        params["w2"], params["b2"],
        params["w3"], params["b3"],
        params["w4"], params["b4"],
        params["w5_row"], params["b5"],
    ]

    def resident_spec(arr):
        # Full-array block whose block index never changes across the grid
        # -> DMA'd once, stays VMEM-resident for every batch tile.
        return pl.BlockSpec(arr.shape, lambda i: (0, 0))

    in_specs = ([pl.BlockSpec((tb, din), lambda i: (i, 0))]
                + [resident_spec(a) for a in weight_args])

    flops_per_row = 2 * (din * 1024 + 1024 * 512 + 512 * 256 + 256 * 128 + 128)
    weight_bytes = sum(int(a.size) * a.dtype.itemsize for a in weight_args)
    io_bytes = b_pad * din * 2 + b_pad * 4
    cost = pl.CostEstimate(flops=int(b_pad) * flops_per_row,
                           transcendentals=0,
                           bytes_accessed=weight_bytes + io_bytes)

    out = pl.pallas_call(
        critic_kernel,
        out_shape=jax.ShapeDtypeStruct((b_pad, 1), jnp.float32),
        grid=(n_tiles,),
        in_specs=in_specs,
        out_specs=pl.BlockSpec((tb, 1), lambda i: (i, 0)),
        compiler_params=pltpu.CompilerParams(
            dimension_semantics=("parallel",),
            vmem_limit_bytes=32 * 1024 * 1024),
        cost_estimate=cost,
    )(x, *weight_args)

    return out[:B]


def critics_reference(state, action, params):
    """Pure-JAX reference with the same precision policy as the kernel."""
    x = jnp.concatenate([state, action], axis=1).astype(jnp.bfloat16)
    h = x
    for w, b in ((params["w1"], params["b1"]),
                 (params["w2"], params["b2"]),
                 (params["w3"], params["b3"])):
        z = jnp.dot(h, w, preferred_element_type=jnp.float32) + b
        h = _leaky_relu(z.astype(jnp.bfloat16))
    z4 = (jnp.dot(h, params["w4"], preferred_element_type=jnp.float32)
          + params["b4"])
    h4 = _leaky_relu(z4)
    w5 = params["w5_row"].astype(jnp.float32)
    return jnp.sum(h4 * w5, axis=-1, keepdims=True) + params["b5"]


if __name__ == "__main__":
    state_dim, action_dim, batch = 24, 8, 2

    key = jax.random.PRNGKey(0)
    k_params, k_state, k_action = jax.random.split(key, 3)

    params = make_critic_params(k_params, state_dim, action_dim)
    state = jax.random.normal(k_state, (batch, state_dim), dtype=jnp.float32)
    action = jax.random.normal(k_action, (batch, action_dim), dtype=jnp.float32)

    q = critics_forward(state, action, params)
    jax.block_until_ready(q)

    q_ref = critics_reference(state, action, params)
    assert q.shape == (batch, 1), q.shape
    assert jnp.allclose(q, q_ref, atol=1e-4, rtol=1e-2), (q, q_ref)

    print("KERNEL_OK")
</pallas_src>

<mosaic_0001>
module attributes {stable_mosaic.version = 11 : i64} {
  func.func @critic_kernel(%arg0: i32, %arg1: memref<8x32xbf16, #tpu.memory_space<vmem>>, %arg2: memref<32x1024xbf16, #tpu.memory_space<vmem>>, %arg3: memref<1x1024xf32, #tpu.memory_space<vmem>>, %arg4: memref<1024x512xbf16, #tpu.memory_space<vmem>>, %arg5: memref<1x512xf32, #tpu.memory_space<vmem>>, %arg6: memref<512x256xbf16, #tpu.memory_space<vmem>>, %arg7: memref<1x256xf32, #tpu.memory_space<vmem>>, %arg8: memref<256x128xbf16, #tpu.memory_space<vmem>>, %arg9: memref<1x128xf32, #tpu.memory_space<vmem>>, %arg10: memref<1x128xbf16, #tpu.memory_space<vmem>>, %arg11: memref<1x1xf32, #tpu.memory_space<vmem>>, %arg12: memref<8x1xf32, #tpu.memory_space<vmem>>) attributes {dimension_semantics = [#tpu.dimension_semantics<parallel>], iteration_bounds = array<i64: 1>, scalar_prefetch = 0 : i64, scratch_operands = 0 : i64, tpu.core_type = #tpu.core_type<tc>, window_params = [{transform_indices = @transform_0, window_bounds = array<i64: 8, 32>}, {pipeline_mode = #tpu.pipeline_mode<synchronous>, transform_indices = @transform_1, window_bounds = array<i64: 32, 1024>}, {pipeline_mode = #tpu.pipeline_mode<synchronous>, transform_indices = @transform_2, window_bounds = array<i64: 1, 1024>}, {pipeline_mode = #tpu.pipeline_mode<synchronous>, transform_indices = @transform_3, window_bounds = array<i64: 1024, 512>}, {pipeline_mode = #tpu.pipeline_mode<synchronous>, transform_indices = @transform_4, window_bounds = array<i64: 1, 512>}, {pipeline_mode = #tpu.pipeline_mode<synchronous>, transform_indices = @transform_5, window_bounds = array<i64: 512, 256>}, {pipeline_mode = #tpu.pipeline_mode<synchronous>, transform_indices = @transform_6, window_bounds = array<i64: 1, 256>}, {pipeline_mode = #tpu.pipeline_mode<synchronous>, transform_indices = @transform_7, window_bounds = array<i64: 256, 128>}, {pipeline_mode = #tpu.pipeline_mode<synchronous>, transform_indices = @transform_8, window_bounds = array<i64: 1, 128>}, {pipeline_mode = #tpu.pipeline_mode<synchronous>, transform_indices = @transform_9, window_bounds = array<i64: 1, 128>}, {pipeline_mode = #tpu.pipeline_mode<synchronous>, transform_indices = @transform_10, window_bounds = array<i64: 1, 1>}, {transform_indices = @transform_11, window_bounds = array<i64: 8, 1>}]} {
    %c0 = arith.constant 0 : index
    %c0_0 = arith.constant 0 : index
    %0 = vector.load %arg1[%c0, %c0_0] : memref<8x32xbf16, #tpu.memory_space<vmem>>, vector<8x32xbf16>
    %c0_1 = arith.constant 0 : index
    %c0_2 = arith.constant 0 : index
    %1 = vector.load %arg2[%c0_1, %c0_2] : memref<32x1024xbf16, #tpu.memory_space<vmem>>, vector<32x1024xbf16>
    %cst = arith.constant dense<0.000000e+00> : vector<8x1024xf32>
    %2 = tpu.matmul %0, %1, %cst {dimension_numbers = #tpu.dot_dimension_numbers<[1], [0], [0], [1], [0, 0, 1, 1], [], []>} : vector<8x32xbf16>, vector<32x1024xbf16>, vector<8x1024xf32> -> vector<8x1024xf32>
    %c0_3 = arith.constant 0 : index
    %c0_4 = arith.constant 0 : index
    %3 = vector.load %arg3[%c0_3, %c0_4] : memref<1x1024xf32, #tpu.memory_space<vmem>>, vector<1x1024xf32>
    %4 = vector.broadcast %3 : vector<1x1024xf32> to vector<8x1024xf32>
    %5 = arith.addf %2, %4 : vector<8x1024xf32>
    %6 = arith.truncf %5 : vector<8x1024xf32> to vector<8x1024xbf16>
    %cst_5 = arith.constant 1.000980e-02 : bf16
    %7 = vector.broadcast %cst_5 : bf16 to vector<8x1024xbf16>
    %8 = arith.mulf %7, %6 : vector<8x1024xbf16>
    %9 = arith.maximumf %6, %8 : vector<8x1024xbf16>
    %c0_6 = arith.constant 0 : index
    %c0_7 = arith.constant 0 : index
    %10 = vector.load %arg4[%c0_6, %c0_7] : memref<1024x512xbf16, #tpu.memory_space<vmem>>, vector<1024x512xbf16>
    %cst_8 = arith.constant dense<0.000000e+00> : vector<8x512xf32>
    %11 = tpu.matmul %9, %10, %cst_8 {dimension_numbers = #tpu.dot_dimension_numbers<[1], [0], [0], [1], [0, 0, 1, 1], [], []>} : vector<8x1024xbf16>, vector<1024x512xbf16>, vector<8x512xf32> -> vector<8x512xf32>
    %c0_9 = arith.constant 0 : index
    %c0_10 = arith.constant 0 : index
    %12 = vector.load %arg5[%c0_9, %c0_10] : memref<1x512xf32, #tpu.memory_space<vmem>>, vector<1x512xf32>
    %13 = vector.broadcast %12 : vector<1x512xf32> to vector<8x512xf32>
    %14 = arith.addf %11, %13 : vector<8x512xf32>
    %15 = arith.truncf %14 : vector<8x512xf32> to vector<8x512xbf16>
    %cst_11 = arith.constant 1.000980e-02 : bf16
    %16 = vector.broadcast %cst_11 : bf16 to vector<8x512xbf16>
    %17 = arith.mulf %16, %15 : vector<8x512xbf16>
    %18 = arith.maximumf %15, %17 : vector<8x512xbf16>
    %c0_12 = arith.constant 0 : index
    %c0_13 = arith.constant 0 : index
    %19 = vector.load %arg6[%c0_12, %c0_13] : memref<512x256xbf16, #tpu.memory_space<vmem>>, vector<512x256xbf16>
    %cst_14 = arith.constant dense<0.000000e+00> : vector<8x256xf32>
    %20 = tpu.matmul %18, %19, %cst_14 {dimension_numbers = #tpu.dot_dimension_numbers<[1], [0], [0], [1], [0, 0, 1, 1], [], []>} : vector<8x512xbf16>, vector<512x256xbf16>, vector<8x256xf32> -> vector<8x256xf32>
    %c0_15 = arith.constant 0 : index
    %c0_16 = arith.constant 0 : index
    %21 = vector.load %arg7[%c0_15, %c0_16] : memref<1x256xf32, #tpu.memory_space<vmem>>, vector<1x256xf32>
    %22 = vector.broadcast %21 : vector<1x256xf32> to vector<8x256xf32>
    %23 = arith.addf %20, %22 : vector<8x256xf32>
    %24 = arith.truncf %23 : vector<8x256xf32> to vector<8x256xbf16>
    %cst_17 = arith.constant 1.000980e-02 : bf16
    %25 = vector.broadcast %cst_17 : bf16 to vector<8x256xbf16>
    %26 = arith.mulf %25, %24 : vector<8x256xbf16>
    %27 = arith.maximumf %24, %26 : vector<8x256xbf16>
    %c0_18 = arith.constant 0 : index
    %c0_19 = arith.constant 0 : index
    %28 = vector.load %arg8[%c0_18, %c0_19] : memref<256x128xbf16, #tpu.memory_space<vmem>>, vector<256x128xbf16>
    %cst_20 = arith.constant dense<0.000000e+00> : vector<8x128xf32>
    %29 = tpu.matmul %27, %28, %cst_20 {dimension_numbers = #tpu.dot_dimension_numbers<[1], [0], [0], [1], [0, 0, 1, 1], [], []>} : vector<8x256xbf16>, vector<256x128xbf16>, vector<8x128xf32> -> vector<8x128xf32>
    %c0_21 = arith.constant 0 : index
    %c0_22 = arith.constant 0 : index
    %30 = vector.load %arg9[%c0_21, %c0_22] : memref<1x128xf32, #tpu.memory_space<vmem>>, vector<1x128xf32>
    %31 = vector.broadcast %30 : vector<1x128xf32> to vector<8x128xf32>
    %32 = arith.addf %29, %31 : vector<8x128xf32>
    %cst_23 = arith.constant 0.00999999977 : f32
    %33 = vector.broadcast %cst_23 : f32 to vector<8x128xf32>
    %34 = arith.mulf %33, %32 : vector<8x128xf32>
    %35 = arith.maximumf %32, %34 : vector<8x128xf32>
    %c0_24 = arith.constant 0 : index
    %c0_25 = arith.constant 0 : index
    %36 = vector.load %arg10[%c0_24, %c0_25] : memref<1x128xbf16, #tpu.memory_space<vmem>>, vector<1x128xbf16>
    %37 = arith.extf %36 : vector<1x128xbf16> to vector<1x128xf32>
    %38 = vector.broadcast %37 : vector<1x128xf32> to vector<8x128xf32>
    %39 = arith.mulf %35, %38 : vector<8x128xf32>
    %cst_26 = arith.constant dense<0.000000e+00> : vector<8xf32>
    %40 = vector.multi_reduction <add>, %39, %cst_26 [1] : vector<8x128xf32> to vector<8xf32>
    %41 = vector.shape_cast %40 : vector<8xf32> to vector<8x1xf32>
    %c0_27 = arith.constant 0 : index
    %c0_28 = arith.constant 0 : index
    %42 = vector.load %arg11[%c0_27, %c0_28] : memref<1x1xf32, #tpu.memory_space<vmem>>, vector<1x1xf32>
    %43 = vector.broadcast %42 : vector<1x1xf32> to vector<8x1xf32>
    %44 = arith.addf %41, %43 : vector<8x1xf32>
    %c0_29 = arith.constant 0 : index
    %c0_30 = arith.constant 0 : index
    %45 = vector.load %arg12[%c0_29, %c0_30] : memref<8x1xf32, #tpu.memory_space<vmem>>, vector<8x1xf32>
    tpu.vector_store %arg12[%c0_29, %c0_30], %44 {strides = array<i32>} : memref<8x1xf32, #tpu.memory_space<vmem>>, vector<8x1xf32>,
    return
  }
  func.func @transform_0(%arg0: i32) -> (i32, i32) {
    %c0_i32 = arith.constant 0 : i32
    %c0_i32_0 = arith.constant 0 : i32
    return %arg0, %c0_i32 : i32, i32
  }
  func.func @transform_1(%arg0: i32) -> (i32, i32) {
    %c0_i32 = arith.constant 0 : i32
    %c0_i32_0 = arith.constant 0 : i32
    %c0_i32_1 = arith.constant 0 : i32
    return %c0_i32, %c0_i32_0 : i32, i32
  }
  func.func @transform_2(%arg0: i32) -> (i32, i32) {
    %c0_i32 = arith.constant 0 : i32
    %c0_i32_0 = arith.constant 0 : i32
    %c0_i32_1 = arith.constant 0 : i32
    return %c0_i32, %c0_i32_0 : i32, i32
  }
  func.func @transform_3(%arg0: i32) -> (i32, i32) {
    %c0_i32 = arith.constant 0 : i32
    %c0_i32_0 = arith.constant 0 : i32
    %c0_i32_1 = arith.constant 0 : i32
    return %c0_i32, %c0_i32_0 : i32, i32
  }
  func.func @transform_4(%arg0: i32) -> (i32, i32) {
    %c0_i32 = arith.constant 0 : i32
    %c0_i32_0 = arith.constant 0 : i32
    %c0_i32_1 = arith.constant 0 : i32
    return %c0_i32, %c0_i32_0 : i32, i32
  }
  func.func @transform_5(%arg0: i32) -> (i32, i32) {
    %c0_i32 = arith.constant 0 : i32
    %c0_i32_0 = arith.constant 0 : i32
    %c0_i32_1 = arith.constant 0 : i32
    return %c0_i32, %c0_i32_0 : i32, i32
  }
  func.func @transform_6(%arg0: i32) -> (i32, i32) {
    %c0_i32 = arith.constant 0 : i32
    %c0_i32_0 = arith.constant 0 : i32
    %c0_i32_1 = arith.constant 0 : i32
    return %c0_i32, %c0_i32_0 : i32, i32
  }
  func.func @transform_7(%arg0: i32) -> (i32, i32) {
    %c0_i32 = arith.constant 0 : i32
    %c0_i32_0 = arith.constant 0 : i32
    %c0_i32_1 = arith.constant 0 : i32
    return %c0_i32, %c0_i32_0 : i32, i32
  }
  func.func @transform_8(%arg0: i32) -> (i32, i32) {
    %c0_i32 = arith.constant 0 : i32
    %c0_i32_0 = arith.constant 0 : i32
    %c0_i32_1 = arith.constant 0 : i32
    return %c0_i32, %c0_i32_0 : i32, i32
  }
  func.func @transform_9(%arg0: i32) -> (i32, i32) {
    %c0_i32 = arith.constant 0 : i32
    %c0_i32_0 = arith.constant 0 : i32
    %c0_i32_1 = arith.constant 0 : i32
    return %c0_i32, %c0_i32_0 : i32, i32
  }
  func.func @transform_10(%arg0: i32) -> (i32, i32) {
    %c0_i32 = arith.constant 0 : i32
    %c0_i32_0 = arith.constant 0 : i32
    %c0_i32_1 = arith.constant 0 : i32
    return %c0_i32, %c0_i32_0 : i32, i32
  }
  func.func @transform_11(%arg0: i32) -> (i32, i32) {
    %c0_i32 = arith.constant 0 : i32
    %c0_i32_0 = arith.constant 0 : i32
    return %arg0, %c0_i32 : i32, i32
  }
}

</mosaic_0001>

<llo_original>
// kernel: tpu_custom_call.1
$region0: #{tpu_custom_call.1}
  #allocation0 [shape = 'u32[]', space=smem, size = 0x4, offset = 0x4, fixed_abs, tag = 'smem constant byte address 0x4 - core index']
  #allocation1 [shape = 'u32[144,128]{1,0:T(1,128)}', space=vmem, size = 0x12000, scoped, tag = 'internal scratch']
  #allocation2 [shape = 'f32[1,1]{1,0:T(1,128)S(1)}', space=vmem, size = 0x200, scoped, tag = 'scoped memory for tpu_custom_call.1']
  %s0 = inlined_call_operand.hbm [shape: bf16[8,32], index: 0, kind: input, shape index: {}]
  %s1 = inlined_call_operand.hbm [shape: bf16[32,1024], index: 1, kind: input, shape index: {}]
  %s2 = inlined_call_operand.vmem [shape: f32[1,1024], index: 2, kind: input, shape index: {}]
  %s3 = inlined_call_operand.hbm [shape: bf16[1024,512], index: 3, kind: input, shape index: {}]
  %s4 = inlined_call_operand.vmem [shape: f32[1,512], index: 4, kind: input, shape index: {}]
  %s5 = inlined_call_operand.hbm [shape: bf16[512,256], index: 5, kind: input, shape index: {}]
  %s6 = inlined_call_operand.vmem [shape: f32[1,256], index: 6, kind: input, shape index: {}]
  %s7 = inlined_call_operand.hbm [shape: bf16[256,128], index: 7, kind: input, shape index: {}]
  %s8 = inlined_call_operand.vmem [shape: f32[1,128], index: 8, kind: input, shape index: {}]
  %s9 = inlined_call_operand.vmem [shape: bf16[1,128], index: 9, kind: input, shape index: {}]
  %s10 = inlined_call_operand.<no memory space> [shape: f32[1,1], index: 10, kind: input, shape index: {}]
  %s11 = inlined_call_operand.vmem [shape: f32[8,1], index: 11, kind: output, shape index: {}]
  %s12 = sld [smem:[#allocation0]]
  $region74: #{tpu_custom_call.1} parent=0
    _
  %s14 = ssub.s32 1, %s12
  %s15 = scalar_select 0, %s14, %s12
  %v16 = vstv %s10
  %17 = vst [vmem:[#allocation2] sm:$0x1] %v16
  $region1: #{tpu_custom_call.1} parent=0
    #allocation3 [shape = 'u8[2048]{0}', space=vmem, size = 0x800, scoped, tag = 'input window, operand 0, single buffered']
    #allocation4 [shape = 's32[1]{0}', space=sflag, size = 0x4, scoped, tag = 'scoped memory for tpu_custom_call.1']
    #allocation5 [shape = 'u8[65536]{0}', space=vmem, size = 0x10000, scoped, tag = 'input window, operand 1, single buffered']
    #allocation6 [shape = 's32[1]{0}', space=sflag, size = 0x4, scoped, tag = 'scoped memory for tpu_custom_call.1']
    #allocation7 [shape = 'u8[1048576]{0}', space=vmem, size = 0x100000, scoped, tag = 'input window, operand 3, single buffered']
    #allocation8 [shape = 'u8[262144]{0}', space=vmem, size = 0x40000, scoped, tag = 'input window, operand 5, single buffered']
    #allocation9 [shape = 's32[1]{0}', space=sflag, size = 0x4, scoped, tag = 'scoped memory for tpu_custom_call.1']
    #allocation10 [shape = 'u8[65536]{0}', space=vmem, size = 0x10000, scoped, tag = 'input window, operand 7, single buffered']
    %18 = vsyncpa [#allocation4], 0
    %19 = vsyncpa [#allocation6], 0
    %20 = vsyncpa [#allocation9], 0
    // Predicated region
    $region2: #{tpu_custom_call.1} parent=1 // pred_check
      _
    $region3: #{tpu_custom_call.1} parent=1 // pred_check_branch
      %22 = sbr.rel (0) target = $region5
    $region4: #{tpu_custom_call.1} parent=1 // pred_region
      %s24 = ssub.s32 64, 64
      %25 = vsyncadd [#allocation4], %s24
      %s27 = sshll.u32 [#allocation3], 4
      %s28 = int_to_ptr.vmem [resolvable:$true] %s27
      %30 = dma.hbm_to_vmem [thread:$0]  %s0, 64, %s28, [#allocation4]
    $region5: #{tpu_custom_call.1} parent=1 // pred_fallthru
      _
    // Predicated region
    $region6: #{tpu_custom_call.1} parent=1 // pred_check
      _
    $region7: #{tpu_custom_call.1} parent=1 // pred_check_branch
      %32 = sbr.rel (0) target = $region9
    $region8: #{tpu_custom_call.1} parent=1 // pred_region
      %s34 = ssub.s32 2048, 2048
      %35 = vsyncadd [#allocation6], %s34
      %s36 = sshll.u32 [#allocation5], 4
      %s37 = int_to_ptr.vmem [resolvable:$true] %s36
      %42 = dma.hbm_to_vmem [thread:$0]  %s1, 2048, %s37, [#allocation6], 512, 512, 32
    $region9: #{tpu_custom_call.1} parent=1 // pred_fallthru
      _
    // Predicated region
    $region10: #{tpu_custom_call.1} parent=1 // pred_check
      _
    $region11: #{tpu_custom_call.1} parent=1 // pred_check_branch
      %44 = sbr.rel (0) target = $region13
    $region12: #{tpu_custom_call.1} parent=1 // pred_region
      _
    $region13: #{tpu_custom_call.1} parent=1 // pred_fallthru
      _
    // Predicated region
    $region14: #{tpu_custom_call.1} parent=1 // pred_check
      _
    $region15: #{tpu_custom_call.1} parent=1 // pred_check_branch
      %46 = sbr.rel (0) target = $region17
    $region16: #{tpu_custom_call.1} parent=1 // pred_region
      %s48 = ssub.s32 32768, 32768
      %49 = vsyncadd [#allocation6], %s48
      %s50 = sshll.u32 [#allocation7], 4
      %s51 = int_to_ptr.vmem [resolvable:$true] %s50
      %56 = dma.hbm_to_vmem [thread:$0]  %s3, 32768, %s51, [#allocation6], 256, 256, 16
    $region17: #{tpu_custom_call.1} parent=1 // pred_fallthru
      _
    // Predicated region
    $region18: #{tpu_custom_call.1} parent=1 // pred_check
      _
    $region19: #{tpu_custom_call.1} parent=1 // pred_check_branch
      %58 = sbr.rel (0) target = $region21
    $region20: #{tpu_custom_call.1} parent=1 // pred_region
      _
    $region21: #{tpu_custom_call.1} parent=1 // pred_fallthru
      _
    // Predicated region
    $region22: #{tpu_custom_call.1} parent=1 // pred_check
      _
    $region23: #{tpu_custom_call.1} parent=1 // pred_check_branch
      %60 = sbr.rel (0) target = $region25
    $region24: #{tpu_custom_call.1} parent=1 // pred_region
      %s62 = ssub.s32 8192, 8192
      %63 = vsyncadd [#allocation9], %s62
      %s64 = sshll.u32 [#allocation8], 4
      %s65 = int_to_ptr.vmem [resolvable:$true] %s64
      %70 = dma.hbm_to_vmem [thread:$0]  %s5, 8192, %s65, [#allocation9], 128, 128, 8
    $region25: #{tpu_custom_call.1} parent=1 // pred_fallthru
      _
    // Predicated region
    $region26: #{tpu_custom_call.1} parent=1 // pred_check
      _
    $region27: #{tpu_custom_call.1} parent=1 // pred_check_branch
      %72 = sbr.rel (0) target = $region29
    $region28: #{tpu_custom_call.1} parent=1 // pred_region
      _
    $region29: #{tpu_custom_call.1} parent=1 // pred_fallthru
      _
    // Predicated region
    $region30: #{tpu_custom_call.1} parent=1 // pred_check
      _
    $region31: #{tpu_custom_call.1} parent=1 // pred_check_branch
      %74 = sbr.rel (0) target = $region33
    $region32: #{tpu_custom_call.1} parent=1 // pred_region
      %s76 = ssub.s32 2048, 2048
      %77 = vsyncadd [#allocation9], %s76
      %s78 = sshll.u32 [#allocation10], 4
      %s79 = int_to_ptr.vmem [resolvable:$true] %s78
      %84 = dma.hbm_to_vmem [thread:$0]  %s7, 2048, %s79, [#allocation9], 64, 64, 4
    $region33: #{tpu_custom_call.1} parent=1 // pred_fallthru
      _
    // Predicated region
    $region34: #{tpu_custom_call.1} parent=1 // pred_check
      _
    $region35: #{tpu_custom_call.1} parent=1 // pred_check_branch
      %86 = sbr.rel (0) target = $region37
    $region36: #{tpu_custom_call.1} parent=1 // pred_region
      _
    $region37: #{tpu_custom_call.1} parent=1 // pred_fallthru
      _
    // Predicated region
    $region38: #{tpu_custom_call.1} parent=1 // pred_check
      _
    $region39: #{tpu_custom_call.1} parent=1 // pred_check_branch
      %88 = sbr.rel (0) target = $region41
    $region40: #{tpu_custom_call.1} parent=1 // pred_region
      _
    $region41: #{tpu_custom_call.1} parent=1 // pred_fallthru
      _
    // Predicated region
    $region42: #{tpu_custom_call.1} parent=1 // pred_check
      _
    $region43: #{tpu_custom_call.1} parent=1 // pred_check_branch
      %90 = sbr.rel (0) target = $region45
    $region44: #{tpu_custom_call.1} parent=1 // pred_region
      _
    $region45: #{tpu_custom_call.1} parent=1 // pred_fallthru
      _
    // Predicated region
    $region46: #{tpu_custom_call.1} parent=1 // pred_check
      _
    $region47: #{tpu_custom_call.1} parent=1 // pred_check_branch
      %92 = sbr.rel (0) target = $region49
    $region48: #{tpu_custom_call.1} parent=1 // pred_region
      %93 = dma.done [#allocation4], 64
    $region49: #{tpu_custom_call.1} parent=1 // pred_fallthru
      _
    // Predicated region
    $region50: #{tpu_custom_call.1} parent=1 // pred_check
      _
    $region51: #{tpu_custom_call.1} parent=1 // pred_check_branch
      %95 = sbr.rel (0) target = $region53
    $region52: #{tpu_custom_call.1} parent=1 // pred_region
      %96 = dma.done [#allocation6], 2048
    $region53: #{tpu_custom_call.1} parent=1 // pred_fallthru
      _
    // Predicated region
    $region54: #{tpu_custom_call.1} parent=1 // pred_check
      _
    $region55: #{tpu_custom_call.1} parent=1 // pred_check_branch
      %98 = sbr.rel (0) target = $region57
    $region56: #{tpu_custom_call.1} parent=1 // pred_region
      %99 = dma.done [#allocation6], 32768
    $region57: #{tpu_custom_call.1} parent=1 // pred_fallthru
      _
    // Predicated region
    $region58: #{tpu_custom_call.1} parent=1 // pred_check
      _
    $region59: #{tpu_custom_call.1} parent=1 // pred_check_branch
      %101 = sbr.rel (0) target = $region61
    $region60: #{tpu_custom_call.1} parent=1 // pred_region
      %102 = dma.done [#allocation9], 8192
    $region61: #{tpu_custom_call.1} parent=1 // pred_fallthru
      _
    // Predicated region
    $region62: #{tpu_custom_call.1} parent=1 // pred_check
      _
    $region63: #{tpu_custom_call.1} parent=1 // pred_check_branch
      %104 = sbr.rel (0) target = $region65
    $region64: #{tpu_custom_call.1} parent=1 // pred_region
      %105 = dma.done [#allocation9], 2048
    $region65: #{tpu_custom_call.1} parent=1 // pred_fallthru
      _
    %v108 = vld [vmem:[#allocation3] sm:$0xf]
    %v109 = vld [vmem:[#allocation5] sm:$0xff]
    %v110 = vld [vmem:[#allocation5 + $0x8] sm:$0xff]
    %v111 = vld [vmem:[#allocation5 + $0x10] sm:$0xff]
    %v112 = vld [vmem:[#allocation5 + $0x18] sm:$0xff]
    %v113 = vld [vmem:[#allocation5 + $0x20] sm:$0xff]
    %v114 = vld [vmem:[#allocation5 + $0x28] sm:$0xff]
    %v115 = vld [vmem:[#allocation5 + $0x30] sm:$0xff]
    %v116 = vld [vmem:[#allocation5 + $0x38] sm:$0xff]
    %v117 = vld [vmem:[#allocation5 + $0x40] sm:$0xff]
    %v118 = vld [vmem:[#allocation5 + $0x48] sm:$0xff]
    %v119 = vld [vmem:[#allocation5 + $0x50] sm:$0xff]
    %v120 = vld [vmem:[#allocation5 + $0x58] sm:$0xff]
    %v121 = vld [vmem:[#allocation5 + $0x60] sm:$0xff]
    %v122 = vld [vmem:[#allocation5 + $0x68] sm:$0xff]
    %v123 = vld [vmem:[#allocation5 + $0x70] sm:$0xff]
    %v124 = vld [vmem:[#allocation5 + $0x78] sm:$0xff]
    %v125 = vld [vmem:[%s2] sm:$0xff]
    %v127 = vlaneseq
    %v128 = vshrl.u32 %v127, 7
    %v129 = vsub.s32 0, %v128
    %v130 = vrot.slane %v125, %v129
    %v131 = vlaneseq
    %v132 = vshrl.u32 %v131, 7
    %v133 = vsub.s32 1, %v132
    %v134 = vrot.slane %v125, %v133
    %v135 = vlaneseq
    %v136 = vshrl.u32 %v135, 7
    %v137 = vsub.s32 2, %v136
    %v138 = vrot.slane %v125, %v137
    %v139 = vlaneseq
    %v140 = vshrl.u32 %v139, 7
    %v141 = vsub.s32 3, %v140
    %v142 = vrot.slane %v125, %v141
    %v143 = vlaneseq
    %v144 = vshrl.u32 %v143, 7
    %v145 = vsub.s32 4, %v144
    %v146 = vrot.slane %v125, %v145
    %v147 = vlaneseq
    %v148 = vshrl.u32 %v147, 7
    %v149 = vsub.s32 5, %v148
    %v150 = vrot.slane %v125, %v149
    %v151 = vlaneseq
    %v152 = vshrl.u32 %v151, 7
    %v153 = vsub.s32 6, %v152
    %v154 = vrot.slane %v125, %v153
    %v155 = vlaneseq
    %v156 = vshrl.u32 %v155, 7
    %v157 = vsub.s32 7, %v156
    %v158 = vrot.slane %v125, %v157
    %v183 = vunpack.c.l.b16 %v109
    %v184 = vunpack.c.h.b16 %v109
    %v185 = vunpack.c.l.b16 %v110
    %v186 = vunpack.c.h.b16 %v110
    %v187 = vunpack.c.l.b16 %v111
    %v188 = vunpack.c.h.b16 %v111
    %v189 = vunpack.c.l.b16 %v112
    %v190 = vunpack.c.h.b16 %v112
    %v191 = vunpack.c.l.b16 %v113
    %v192 = vunpack.c.h.b16 %v113
    %v193 = vunpack.c.l.b16 %v114
    %v194 = vunpack.c.h.b16 %v114
    %v195 = vunpack.c.l.b16 %v115
    %v196 = vunpack.c.h.b16 %v115
    %v197 = vunpack.c.l.b16 %v116
    %v198 = vunpack.c.h.b16 %v116
    %v199 = vunpack.c.l.b16 %v117
    %v200 = vunpack.c.h.b16 %v117
    %v201 = vunpack.c.l.b16 %v118
    %v202 = vunpack.c.h.b16 %v118
    %v203 = vunpack.c.l.b16 %v119
    %v204 = vunpack.c.h.b16 %v119
    %v205 = vunpack.c.l.b16 %v120
    %v206 = vunpack.c.h.b16 %v120
    %v207 = vunpack.c.l.b16 %v121
    %v208 = vunpack.c.h.b16 %v121
    %v209 = vunpack.c.l.b16 %v122
    %v210 = vunpack.c.h.b16 %v122
    %v211 = vunpack.c.l.b16 %v123
    %v212 = vunpack.c.h.b16 %v123
    %v213 = vunpack.c.l.b16 %v124
    %v214 = vunpack.c.h.b16 %v124
    %v215 = vpack.c.b16 %v191, %v183
    %v216 = vpack.c.b16 %v192, %v184
    %v217 = vpack.c.b16 %v193, %v185
    %v218 = vpack.c.b16 %v194, %v186
    %v219 = vpack.c.b16 %v195, %v187
    %v220 = vpack.c.b16 %v196, %v188
    %v221 = vpack.c.b16 %v197, %v189
    %v222 = vpack.c.b16 %v198, %v190
    %v223 = vpack.c.b16 %v207, %v199
    %v224 = vpack.c.b16 %v208, %v200
    %v225 = vpack.c.b16 %v209, %v201
    %v226 = vpack.c.b16 %v210, %v202
    %v227 = vpack.c.b16 %v211, %v203
    %v228 = vpack.c.b16 %v212, %v204
    %v229 = vpack.c.b16 %v213, %v205
    %v230 = vpack.c.b16 %v214, %v206
    %vm247 = vcmask 261120
    %v249 = vsel %vm247, %v108, 0
    %251 = vmatprep.subr.bf16.mxu0 %v216
    %252 = vmatpush1.bf16.msra.mxu0 %v215
    %253 = vmatprep.subr.bf16.mxu0 %v224
    %254 = vmatpush1.bf16.msra.mxu0 %v223
    %255 = vmatprep.subr.bf16.mxu0 0
    %256 = vmatpush1.bf16.msra.mxu0 0
    %257 = vmatprep.subr.bf16.mxu0 0
    %258 = vmatpush1.bf16.msra.mxu0 0
    %259 = vmatprep.subr.bf16.mxu0 0
    %260 = vmatpush1.bf16.msra.mxu0 0
    %261 = vmatprep.subr.bf16.mxu0 0
    %262 = vmatpush1.bf16.msra.mxu0 0
    %263 = vmatprep.subr.bf16.mxu0 0
    %264 = vmatpush1.bf16.msra.mxu0 0
    %265 = vmatprep.subr.bf16.mxu0 0
    %266 = vmatpush1.bf16.msra.mxu0 0
    %267 = vmatprep.subr.bf16.mxu0 0
    %268 = vmatpush1.bf16.msra.mxu0 0
    %269 = vmatprep.subr.bf16.mxu0 0
    %270 = vmatpush1.bf16.msra.mxu0 0
    %271 = vmatprep.subr.bf16.mxu0 0
    %272 = vmatpush1.bf16.msra.mxu0 0
    %273 = vmatprep.subr.bf16.mxu0 0
    %274 = vmatpush1.bf16.msra.mxu0 0
    %275 = vmatprep.subr.bf16.mxu0 0
    %276 = vmatpush1.bf16.msra.mxu0 0
    %277 = vmatprep.subr.bf16.mxu0 0
    %278 = vmatpush1.bf16.msra.mxu0 0
    %279 = vmatprep.subr.bf16.mxu0 0
    %280 = vmatpush1.bf16.msra.mxu0 0
    %281 = vmatprep.subr.bf16.mxu0 0
    %282 = vmatpush1.bf16.msra.mxu0 0
    %283 = vmatprep.mubr.bf16.mxu0 0
    %284 = vmatmul.mubr.bf16.gmra.mrb[0].mxu0 %v249
    %v285 = vpop.f32.mrb[0].mxu0
    %v286 = vadd.f32 %v130, %v285
    %v287 = vpop.f32.mrb[0].mxu0
    %v288 = vadd.f32 %v134, %v287
    %v289 = vpop.f32.mrb[0].mxu0
    %v290 = vpop.f32.mrb[0].mxu0
    %291 = vdwg.mxu0
    %292 = vmatprep.subr.bf16.mxu0 %v218
    %293 = vmatpush1.bf16.msra.mxu0 %v217
    %294 = vmatprep.subr.bf16.mxu0 %v226
    %295 = vmatpush1.bf16.msra.mxu0 %v225
    %296 = vmatprep.subr.bf16.mxu0 0
    %297 = vmatpush1.bf16.msra.mxu0 0
    %298 = vmatprep.subr.bf16.mxu0 0
    %299 = vmatpush1.bf16.msra.mxu0 0
    %300 = vmatprep.subr.bf16.mxu0 0
    %301 = vmatpush1.bf16.msra.mxu0 0
    %302 = vmatprep.subr.bf16.mxu0 0
    %303 = vmatpush1.bf16.msra.mxu0 0
    %304 = vmatprep.subr.bf16.mxu0 0
    %305 = vmatpush1.bf16.msra.mxu0 0
    %306 = vmatprep.subr.bf16.mxu0 0
    %307 = vmatpush1.bf16.msra.mxu0 0
    %308 = vmatprep.subr.bf16.mxu0 0
    %309 = vmatpush1.bf16.msra.mxu0 0
    %310 = vmatprep.subr.bf16.mxu0 0
    %311 = vmatpush1.bf16.msra.mxu0 0
    %312 = vmatprep.subr.bf16.mxu0 0
    %313 = vmatpush1.bf16.msra.mxu0 0
    %314 = vmatprep.subr.bf16.mxu0 0
    %315 = vmatpush1.bf16.msra.mxu0 0
    %316 = vmatprep.subr.bf16.mxu0 0
    %317 = vmatpush1.bf16.msra.mxu0 0
    %318 = vmatprep.subr.bf16.mxu0 0
    %319 = vmatpush1.bf16.msra.mxu0 0
    %320 = vmatprep.subr.bf16.mxu0 0
    %321 = vmatpush1.bf16.msra.mxu0 0
    %322 = vmatprep.subr.bf16.mxu0 0
    %323 = vmatpush1.bf16.msra.mxu0 0
    %324 = vmatprep.mubr.bf16.mxu0 0
    %325 = vmatmul.mubr.bf16.gmra.mrb[0].mxu0 %v249
    %v326 = vpop.f32.mrb[0].mxu0
    %v327 = vadd.f32 %v138, %v326
    %v328 = vpop.f32.mrb[0].mxu0
    %v329 = vadd.f32 %v142, %v328
    %v330 = vpop.f32.mrb[0].mxu0
    %v331 = vpop.f32.mrb[0].mxu0
    %332 = vdwg.mxu0
    %333 = vmatprep.subr.bf16.mxu0 %v220
    %334 = vmatpush1.bf16.msra.mxu0 %v219
    %335 = vmatprep.subr.bf16.mxu0 %v228
    %336 = vmatpush1.bf16.msra.mxu0 %v227
    %337 = vmatprep.subr.bf16.mxu0 0
    %338 = vmatpush1.bf16.msra.mxu0 0
    %339 = vmatprep.subr.bf16.mxu0 0
    %340 = vmatpush1.bf16.msra.mxu0 0
    %341 = vmatprep.subr.bf16.mxu0 0
    %342 = vmatpush1.bf16.msra.mxu0 0
    %343 = vmatprep.subr.bf16.mxu0 0
    %344 = vmatpush1.bf16.msra.mxu0 0
    %345 = vmatprep.subr.bf16.mxu0 0
    %346 = vmatpush1.bf16.msra.mxu0 0
    %347 = vmatprep.subr.bf16.mxu0 0
    %348 = vmatpush1.bf16.msra.mxu0 0
    %349 = vmatprep.subr.bf16.mxu0 0
    %350 = vmatpush1.bf16.msra.mxu0 0
    %351 = vmatprep.subr.bf16.mxu0 0
    %352 = vmatpush1.bf16.msra.mxu0 0
    %353 = vmatprep.subr.bf16.mxu0 0
    %354 = vmatpush1.bf16.msra.mxu0 0
    %355 = vmatprep.subr.bf16.mxu0 0
    %356 = vmatpush1.bf16.msra.mxu0 0
    %357 = vmatprep.subr.bf16.mxu0 0
    %358 = vmatpush1.bf16.msra.mxu0 0
    %359 = vmatprep.subr.bf16.mxu0 0
    %360 = vmatpush1.bf16.msra.mxu0 0
    %361 = vmatprep.subr.bf16.mxu0 0
    %362 = vmatpush1.bf16.msra.mxu0 0
    %363 = vmatprep.subr.bf16.mxu0 0
    %364 = vmatpush1.bf16.msra.mxu0 0
    %365 = vmatprep.mubr.bf16.mxu0 0
    %366 = vmatmul.mubr.bf16.gmra.mrb[0].mxu0 %v249
    %v367 = vpop.f32.mrb[0].mxu0
    %v368 = vadd.f32 %v146, %v367
    %v369 = vpop.f32.mrb[0].mxu0
    %v370 = vadd.f32 %v150, %v369
    %v371 = vpop.f32.mrb[0].mxu0
    %v372 = vpop.f32.mrb[0].mxu0
    %373 = vdwg.mxu0
    %374 = vmatprep.subr.bf16.mxu0 %v222
    %375 = vmatpush1.bf16.msra.mxu0 %v221
    %376 = vmatprep.subr.bf16.mxu0 %v230
    %377 = vmatpush1.bf16.msra.mxu0 %v229
    %378 = vmatprep.subr.bf16.mxu0 0
    %379 = vmatpush1.bf16.msra.mxu0 0
    %380 = vmatprep.subr.bf16.mxu0 0
    %381 = vmatpush1.bf16.msra.mxu0 0
    %382 = vmatprep.subr.bf16.mxu0 0
    %383 = vmatpush1.bf16.msra.mxu0 0
    %384 = vmatprep.subr.bf16.mxu0 0
    %385 = vmatpush1.bf16.msra.mxu0 0
    %386 = vmatprep.subr.bf16.mxu0 0
    %387 = vmatpush1.bf16.msra.mxu0 0
    %388 = vmatprep.subr.bf16.mxu0 0
    %389 = vmatpush1.bf16.msra.mxu0 0
    %390 = vmatprep.subr.bf16.mxu0 0
    %391 = vmatpush1.bf16.msra.mxu0 0
    %392 = vmatprep.subr.bf16.mxu0 0
    %393 = vmatpush1.bf16.msra.mxu0 0
    %394 = vmatprep.subr.bf16.mxu0 0
    %395 = vmatpush1.bf16.msra.mxu0 0
    %396 = vmatprep.subr.bf16.mxu0 0
    %397 = vmatpush1.bf16.msra.mxu0 0
    %398 = vmatprep.subr.bf16.mxu0 0
    %399 = vmatpush1.bf16.msra.mxu0 0
    %400 = vmatprep.subr.bf16.mxu0 0
    %401 = vmatpush1.bf16.msra.mxu0 0
    %402 = vmatprep.subr.bf16.mxu0 0
    %403 = vmatpush1.bf16.msra.mxu0 0
    %404 = vmatprep.subr.bf16.mxu0 0
    %405 = vmatpush1.bf16.msra.mxu0 0
    %406 = vmatprep.mubr.bf16.mxu0 0
    %407 = vmatmul.mubr.bf16.gmra.mrb[0].mxu0 %v249
    %v408 = vpop.f32.mrb[0].mxu0
    %v409 = vadd.f32 %v154, %v408
    %v410 = vpop.f32.mrb[0].mxu0
    %v411 = vadd.f32 %v158, %v410
    %v412 = vpop.f32.mrb[0].mxu0
    %v413 = vpop.f32.mrb[0].mxu0
    %414 = vdwg.mxu0
    %v415 = vpack.c.bf16 %v286, %v286
    %v416 = vpack.c.bf16 %v288, %v288
    %v417 = vpack.c.bf16 %v327, %v327
    %v418 = vpack.c.bf16 %v329, %v329
    %v419 = vpack.c.bf16 %v368, %v368
    %v420 = vpack.c.bf16 %v370, %v370
    %v421 = vpack.c.bf16 %v409, %v409
    %v422 = vpack.c.bf16 %v411, %v411
    %v423 = vmul.bf16 %v415, 1009007652
    %v424 = vmul.bf16 %v416, 1009007652
    %v425 = vmul.bf16 %v417, 1009007652
    %v426 = vmul.bf16 %v418, 1009007652
    %v427 = vmul.bf16 %v419, 1009007652
    %v428 = vmul.bf16 %v420, 1009007652
    %v429 = vmul.bf16 %v421, 1009007652
    %v430 = vmul.bf16 %v422, 1009007652
    %v431 = vmax.bf16 %v415, %v423
    %v432 = vmax.bf16 %v416, %v424
    %v433 = vmax.bf16 %v417, %v425
    %v434 = vmax.bf16 %v418, %v426
    %v435 = vmax.bf16 %v419, %v427
    %v436 = vmax.bf16 %v420, %v428
    %v437 = vmax.bf16 %v421, %v429
    %v438 = vmax.bf16 %v422, %v430
    %v439 = vld [vmem:[#allocation7] sm:$0xff]
    %v440 = vld [vmem:[#allocation7 + $0x8] sm:$0xff]
    %v441 = vld [vmem:[#allocation7 + $0x10] sm:$0xff]
    %v442 = vld [vmem:[#allocation7 + $0x18] sm:$0xff]
    %v443 = vld [vmem:[#allocation7 + $0x20] sm:$0xff]
    %v444 = vld [vmem:[#allocation7 + $0x28] sm:$0xff]
    %v445 = vld [vmem:[#allocation7 + $0x30] sm:$0xff]
    %v446 = vld [vmem:[#allocation7 + $0x38] sm:$0xff]
    %v447 = vld [vmem:[#allocation7 + $0x40] sm:$0xff]
    %v448 = vld [vmem:[#allocation7 + $0x48] sm:$0xff]
    %v449 = vld [vmem:[#allocation7 + $0x50] sm:$0xff]
    %v450 = vld [vmem:[#allocation7 + $0x58] sm:$0xff]
    %v451 = vld [vmem:[#allocation7 + $0x60] sm:$0xff]
    %v452 = vld [vmem:[#allocation7 + $0x68] sm:$0xff]
    %v453 = vld [vmem:[#allocation7 + $0x70] sm:$0xff]
    %v454 = vld [vmem:[#allocation7 + $0x78] sm:$0xff]
    %v455 = vld [vmem:[#allocation7 + $0x80] sm:$0xff]
    %v456 = vld [vmem:[#allocation7 + $0x88] sm:$0xff]
    %v457 = vld [vmem:[#allocation7 + $0x90] sm:$0xff]
    %v458 = vld [vmem:[#allocation7 + $0x98] sm:$0xff]
    %v459 = vld [vmem:[#allocation7 + $0xa0] sm:$0xff]
    %v460 = vld [vmem:[#allocation7 + $0xa8] sm:$0xff]
    %v461 = vld [vmem:[#allocation7 + $0xb0] sm:$0xff]
    %v462 = vld [vmem:[#allocation7 + $0xb8] sm:$0xff]
    %v463 = vld [vmem:[#allocation7 + $0xc0] sm:$0xff]
    %v464 = vld [vmem:[#allocation7 + $0xc8] sm:$0xff]
    %v465 = vld [vmem:[#allocation7 + $0xd0] sm:$0xff]
    %v466 = vld [vmem:[#allocation7 + $0xd8] sm:$0xff]
    %v467 = vld [vmem:[#allocation7 + $0xe0] sm:$0xff]
    %v468 = vld [vmem:[#allocation7 + $0xe8] sm:$0xff]
    %v469 = vld [vmem:[#allocation7 + $0xf0] sm:$0xff]
    %v470 = vld [vmem:[#allocation7 + $0xf8] sm:$0xff]
    %v471 = vld [vmem:[#allocation7 + $0x100] sm:$0xff]
    %v472 = vld [vmem:[#allocation7 + $0x108] sm:$0xff]
    %v473 = vld [vmem:[#allocation7 + $0x110] sm:$0xff]
    %v474 = vld [vmem:[#allocation7 + $0x118] sm:$0xff]
    %v475 = vld [vmem:[#allocation7 + $0x120] sm:$0xff]
    %v476 = vld [vmem:[#allocation7 + $0x128] sm:$0xff]
    %v477 = vld [vmem:[#allocation7 + $0x130] sm:$0xff]
    %v478 = vld [vmem:[#allocation7 + $0x138] sm:$0xff]
    %v479 = vld [vmem:[#allocation7 + $0x140] sm:$0xff]
    %v480 = vld [vmem:[#allocation7 + $0x148] sm:$0xff]
    %v481 = vld [vmem:[#allocation7 + $0x150] sm:$0xff]
    %v482 = vld [vmem:[#allocation7 + $0x158] sm:$0xff]
    %v483 = vld [vmem:[#allocation7 + $0x160] sm:$0xff]
    %v484 = vld [vmem:[#allocation7 + $0x168] sm:$0xff]
    %v485 = vld [vmem:[#allocation7 + $0x170] sm:$0xff]
    %v486 = vld [vmem:[#allocation7 + $0x178] sm:$0xff]
    %v487 = vld [vmem:[#allocation7 + $0x180] sm:$0xff]
    %v488 = vld [vmem:[#allocation7 + $0x188] sm:$0xff]
    %v489 = vld [vmem:[#allocation7 + $0x190] sm:$0xff]
    %v490 = vld [vmem:[#allocation7 + $0x198] sm:$0xff]
    %v491 = vld [vmem:[#allocation7 + $0x1a0] sm:$0xff]
    %v492 = vld [vmem:[#allocation7 + $0x1a8] sm:$0xff]
    %v493 = vld [vmem:[#allocation7 + $0x1b0] sm:$0xff]
    %v494 = vld [vmem:[#allocation7 + $0x1b8] sm:$0xff]
    %v495 = vld [vmem:[#allocation7 + $0x1c0] sm:$0xff]
    %v496 = vld [vmem:[#allocation7 + $0x1c8] sm:$0xff]
    %v497 = vld [vmem:[#allocation7 + $0x1d0] sm:$0xff]
    %v498 = vld [vmem:[#allocation7 + $0x1d8] sm:$0xff]
    %v499 = vld [vmem:[#allocation7 + $0x1e0] sm:$0xff]
    %v500 = vld [vmem:[#allocation7 + $0x1e8] sm:$0xff]
    %v501 = vld [vmem:[#allocation7 + $0x1f0] sm:$0xff]
    %v502 = vld [vmem:[#allocation7 + $0x1f8] sm:$0xff]
    %v503 = vld [vmem:[#allocation7 + $0x200] sm:$0xff]
    %v504 = vld [vmem:[#allocation7 + $0x208] sm:$0xff]
    %v505 = vld [vmem:[#allocation7 + $0x210] sm:$0xff]
    %v506 = vld [vmem:[#allocation7 + $0x218] sm:$0xff]
    %v507 = vld [vmem:[#allocation7 + $0x220] sm:$0xff]
    %v508 = vld [vmem:[#allocation7 + $0x228] sm:$0xff]
    %v509 = vld [vmem:[#allocation7 + $0x230] sm:$0xff]
    %v510 = vld [vmem:[#allocation7 + $0x238] sm:$0xff]
    %v511 = vld [vmem:[#allocation7 + $0x240] sm:$0xff]
    %v512 = vld [vmem:[#allocation7 + $0x248] sm:$0xff]
    %v513 = vld [vmem:[#allocation7 + $0x250] sm:$0xff]
    %v514 = vld [vmem:[#allocation7 + $0x258] sm:$0xff]
    %v515 = vld [vmem:[#allocation7 + $0x260] sm:$0xff]
    %v516 = vld [vmem:[#allocation7 + $0x268] sm:$0xff]
    %v517 = vld [vmem:[#allocation7 + $0x270] sm:$0xff]
    %v518 = vld [vmem:[#allocation7 + $0x278] sm:$0xff]
    %v519 = vld [vmem:[#allocation7 + $0x280] sm:$0xff]
    %v520 = vld [vmem:[#allocation7 + $0x288] sm:$0xff]
    %v521 = vld [vmem:[#allocation7 + $0x290] sm:$0xff]
    %v522 = vld [vmem:[#allocation7 + $0x298] sm:$0xff]
    %v523 = vld [vmem:[#allocation7 + $0x2a0] sm:$0xff]
    %v524 = vld [vmem:[#allocation7 + $0x2a8] sm:$0xff]
    %v525 = vld [vmem:[#allocation7 + $0x2b0] sm:$0xff]
    %v526 = vld [vmem:[#allocation7 + $0x2b8] sm:$0xff]
    %v527 = vld [vmem:[#allocation7 + $0x2c0] sm:$0xff]
    %v528 = vld [vmem:[#allocation7 + $0x2c8] sm:$0xff]
    %v529 = vld [vmem:[#allocation7 + $0x2d0] sm:$0xff]
    %v530 = vld [vmem:[#allocation7 + $0x2d8] sm:$0xff]
    %v531 = vld [vmem:[#allocation7 + $0x2e0] sm:$0xff]
    %v532 = vld [vmem:[#allocation7 + $0x2e8] sm:$0xff]
    %v533 = vld [vmem:[#allocation7 + $0x2f0] sm:$0xff]
    %v534 = vld [vmem:[#allocation7 + $0x2f8] sm:$0xff]
    %v535 = vld [vmem:[#allocation7 + $0x300] sm:$0xff]
    %v536 = vld [vmem:[#allocation7 + $0x308] sm:$0xff]
    %v537 = vld [vmem:[#allocation7 + $0x310] sm:$0xff]
    %v538 = vld [vmem:[#allocation7 + $0x318] sm:$0xff]
    %v539 = vld [vmem:[#allocation7 + $0x320] sm:$0xff]
    %v540 = vld [vmem:[#allocation7 + $0x328] sm:$0xff]
    %v541 = vld [vmem:[#allocation7 + $0x330] sm:$0xff]
    %v542 = vld [vmem:[#allocation7 + $0x338] sm:$0xff]
    %v543 = vld [vmem:[#allocation7 + $0x340] sm:$0xff]
    %v544 = vld [vmem:[#allocation7 + $0x348] sm:$0xff]
    %v545 = vld [vmem:[#allocation7 + $0x350] sm:$0xff]
    %v546 = vld [vmem:[#allocation7 + $0x358] sm:$0xff]
    %v547 = vld [vmem:[#allocation7 + $0x360] sm:$0xff]
    %v548 = vld [vmem:[#allocation7 + $0x368] sm:$0xff]
    %v549 = vld [vmem:[#allocation7 + $0x370] sm:$0xff]
    %v550 = vld [vmem:[#allocation7 + $0x378] sm:$0xff]
    %v551 = vld [vmem:[#allocation7 + $0x380] sm:$0xff]
    %v552 = vld [vmem:[#allocation7 + $0x388] sm:$0xff]
    %v553 = vld [vmem:[#allocation7 + $0x390] sm:$0xff]
    %v554 = vld [vmem:[#allocation7 + $0x398] sm:$0xff]
    %v555 = vld [vmem:[#allocation7 + $0x3a0] sm:$0xff]
    %v556 = vld [vmem:[#allocation7 + $0x3a8] sm:$0xff]
    %v557 = vld [vmem:[#allocation7 + $0x3b0] sm:$0xff]
    %v558 = vld [vmem:[#allocation7 + $0x3b8] sm:$0xff]
    %v559 = vld [vmem:[#allocation7 + $0x3c0] sm:$0xff]
    %v560 = vld [vmem:[#allocation7 + $0x3c8] sm:$0xff]
    %v561 = vld [vmem:[#allocation7 + $0x3d0] sm:$0xff]
    %v562 = vld [vmem:[#allocation7 + $0x3d8] sm:$0xff]
    %v563 = vld [vmem:[#allocation7 + $0x3e0] sm:$0xff]
    %v564 = vld [vmem:[#allocation7 + $0x3e8] sm:$0xff]
    %v565 = vld [vmem:[#allocation7 + $0x3f0] sm:$0xff]
    %v566 = vld [vmem:[#allocation7 + $0x3f8] sm:$0xff]
    %v567 = vld [vmem:[#allocation7 + $0x400] sm:$0xff]
    %v568 = vld [vmem:[#allocation7 + $0x408] sm:$0xff]
    %v569 = vld [vmem:[#allocation7 + $0x410] sm:$0xff]
    %v570 = vld [vmem:[#allocation7 + $0x418] sm:$0xff]
    %v571 = vld [vmem:[#allocation7 + $0x420] sm:$0xff]
    %v572 = vld [vmem:[#allocation7 + $0x428] sm:$0xff]
    %v573 = vld [vmem:[#allocation7 + $0x430] sm:$0xff]
    %v574 = vld [vmem:[#allocation7 + $0x438] sm:$0xff]
    %v575 = vld [vmem:[#allocation7 + $0x440] sm:$0xff]
    %v576 = vld [vmem:[#allocation7 + $0x448] sm:$0xff]
    %v577 = vld [vmem:[#allocation7 + $0x450] sm:$0xff]
    %v578 = vld [vmem:[#allocation7 + $0x458] sm:$0xff]
    %v579 = vld [vmem:[#allocation7 + $0x460] sm:$0xff]
    %v580 = vld [vmem:[#allocation7 + $0x468] sm:$0xff]
    %v581 = vld [vmem:[#allocation7 + $0x470] sm:$0xff]
    %v582 = vld [vmem:[#allocation7 + $0x478] sm:$0xff]
    %v583 = vld [vmem:[#allocation7 + $0x480] sm:$0xff]
    %v584 = vld [vmem:[#allocation7 + $0x488] sm:$0xff]
    %v585 = vld [vmem:[#allocation7 + $0x490] sm:$0xff]
    %v586 = vld [vmem:[#allocation7 + $0x498] sm:$0xff]
    %v587 = vld [vmem:[#allocation7 + $0x4a0] sm:$0xff]
    %v588 = vld [vmem:[#allocation7 + $0x4a8] sm:$0xff]
    %v589 = vld [vmem:[#allocation7 + $0x4b0] sm:$0xff]
    %v590 = vld [vmem:[#allocation7 + $0x4b8] sm:$0xff]
    %v591 = vld [vmem:[#allocation7 + $0x4c0] sm:$0xff]
    %v592 = vld [vmem:[#allocation7 + $0x4c8] sm:$0xff]
    %v593 = vld [vmem:[#allocation7 + $0x4d0] sm:$0xff]
    %v594 = vld [vmem:[#allocation7 + $0x4d8] sm:$0xff]
    %v595 = vld [vmem:[#allocation7 + $0x4e0] sm:$0xff]
    %v596 = vld [vmem:[#allocation7 + $0x4e8] sm:$0xff]
    %v597 = vld [vmem:[#allocation7 + $0x4f0] sm:$0xff]
    %v598 = vld [vmem:[#allocation7 + $0x4f8] sm:$0xff]
    %v599 = vld [vmem:[#allocation7 + $0x500] sm:$0xff]
    %v600 = vld [vmem:[#allocation7 + $0x508] sm:$0xff]
    %v601 = vld [vmem:[#allocation7 + $0x510] sm:$0xff]
    %v602 = vld [vmem:[#allocation7 + $0x518] sm:$0xff]
    %v603 = vld [vmem:[#allocation7 + $0x520] sm:$0xff]
    %v604 = vld [vmem:[#allocation7 + $0x528] sm:$0xff]
    %v605 = vld [vmem:[#allocation7 + $0x530] sm:$0xff]
    %v606 = vld [vmem:[#allocation7 + $0x538] sm:$0xff]
    %v607 = vld [vmem:[#allocation7 + $0x540] sm:$0xff]
    %v608 = vld [vmem:[#allocation7 + $0x548] sm:$0xff]
    %v609 = vld [vmem:[#allocation7 + $0x550] sm:$0xff]
    %v610 = vld [vmem:[#allocation7 + $0x558] sm:$0xff]
    %v611 = vld [vmem:[#allocation7 + $0x560] sm:$0xff]
    %v612 = vld [vmem:[#allocation7 + $0x568] sm:$0xff]
    %v613 = vld [vmem:[#allocation7 + $0x570] sm:$0xff]
    %v614 = vld [vmem:[#allocation7 + $0x578] sm:$0xff]
    %v615 = vld [vmem:[#allocation7 + $0x580] sm:$0xff]
    %v616 = vld [vmem:[#allocation7 + $0x588] sm:$0xff]
    %v617 = vld [vmem:[#allocation7 + $0x590] sm:$0xff]
    %v618 = vld [vmem:[#allocation7 + $0x598] sm:$0xff]
    %v619 = vld [vmem:[#allocation7 + $0x5a0] sm:$0xff]
    %v620 = vld [vmem:[#allocation7 + $0x5a8] sm:$0xff]
    %v621 = vld [vmem:[#allocation7 + $0x5b0] sm:$0xff]
    %v622 = vld [vmem:[#allocation7 + $0x5b8] sm:$0xff]
    %v623 = vld [vmem:[#allocation7 + $0x5c0] sm:$0xff]
    %v624 = vld [vmem:[#allocation7 + $0x5c8] sm:$0xff]
    %v625 = vld [vmem:[#allocation7 + $0x5d0] sm:$0xff]
    %v626 = vld [vmem:[#allocation7 + $0x5d8] sm:$0xff]
    %v627 = vld [vmem:[#allocation7 + $0x5e0] sm:$0xff]
    %v628 = vld [vmem:[#allocation7 + $0x5e8] sm:$0xff]
    %v629 = vld [vmem:[#allocation7 + $0x5f0] sm:$0xff]
    %v630 = vld [vmem:[#allocation7 + $0x5f8] sm:$0xff]
    %v631 = vld [vmem:[#allocation7 + $0x600] sm:$0xff]
    %v632 = vld [vmem:[#allocation7 + $0x608] sm:$0xff]
    %v633 = vld [vmem:[#allocation7 + $0x610] sm:$0xff]
    %v634 = vld [vmem:[#allocation7 + $0x618] sm:$0xff]
    %v635 = vld [vmem:[#allocation7 + $0x620] sm:$0xff]
    %v636 = vld [vmem:[#allocation7 + $0x628] sm:$0xff]
    %v637 = vld [vmem:[#allocation7 + $0x630] sm:$0xff]
    %v638 = vld [vmem:[#allocation7 + $0x638] sm:$0xff]
    %v639 = vld [vmem:[#allocation7 + $0x640] sm:$0xff]
    %v640 = vld [vmem:[#allocation7 + $0x648] sm:$0xff]
    %v641 = vld [vmem:[#allocation7 + $0x650] sm:$0xff]
    %v642 = vld [vmem:[#allocation7 + $0x658] sm:$0xff]
    %v643 = vld [vmem:[#allocation7 + $0x660] sm:$0xff]
    %v644 = vld [vmem:[#allocation7 + $0x668] sm:$0xff]
    %v645 = vld [vmem:[#allocation7 + $0x670] sm:$0xff]
    %v646 = vld [vmem:[#allocation7 + $0x678] sm:$0xff]
    %v647 = vld [vmem:[#allocation7 + $0x680] sm:$0xff]
    %v648 = vld [vmem:[#allocation7 + $0x688] sm:$0xff]
    %v649 = vld [vmem:[#allocation7 + $0x690] sm:$0xff]
    %v650 = vld [vmem:[#allocation7 + $0x698] sm:$0xff]
    %v651 = vld [vmem:[#allocation7 + $0x6a0] sm:$0xff]
    %v652 = vld [vmem:[#allocation7 + $0x6a8] sm:$0xff]
    %v653 = vld [vmem:[#allocation7 + $0x6b0] sm:$0xff]
    %v654 = vld [vmem:[#allocation7 + $0x6b8] sm:$0xff]
    %v655 = vld [vmem:[#allocation7 + $0x6c0] sm:$0xff]
    %v656 = vld [vmem:[#allocation7 + $0x6c8] sm:$0xff]
    %v657 = vld [vmem:[#allocation7 + $0x6d0] sm:$0xff]
    %v658 = vld [vmem:[#allocation7 + $0x6d8] sm:$0xff]
    %v659 = vld [vmem:[#allocation7 + $0x6e0] sm:$0xff]
    %v660 = vld [vmem:[#allocation7 + $0x6e8] sm:$0xff]
    %v661 = vld [vmem:[#allocation7 + $0x6f0] sm:$0xff]
    %v662 = vld [vmem:[#allocation7 + $0x6f8] sm:$0xff]
    %v663 = vld [vmem:[#allocation7 + $0x700] sm:$0xff]
    %v664 = vld [vmem:[#allocation7 + $0x708] sm:$0xff]
    %v665 = vld [vmem:[#allocation7 + $0x710] sm:$0xff]
    %v666 = vld [vmem:[#allocation7 + $0x718] sm:$0xff]
    %v667 = vld [vmem:[#allocation7 + $0x720] sm:$0xff]
    %v668 = vld [vmem:[#allocation7 + $0x728] sm:$0xff]
    %v669 = vld [vmem:[#allocation7 + $0x730] sm:$0xff]
    %v670 = vld [vmem:[#allocation7 + $0x738] sm:$0xff]
    %v671 = vld [vmem:[#allocation7 + $0x740] sm:$0xff]
    %v672 = vld [vmem:[#allocation7 + $0x748] sm:$0xff]
    %v673 = vld [vmem:[#allocation7 + $0x750] sm:$0xff]
    %v674 = vld [vmem:[#allocation7 + $0x758] sm:$0xff]
    %v675 = vld [vmem:[#allocation7 + $0x760] sm:$0xff]
    %v676 = vld [vmem:[#allocation7 + $0x768] sm:$0xff]
    %v677 = vld [vmem:[#allocation7 + $0x770] sm:$0xff]
    %v678 = vld [vmem:[#allocation7 + $0x778] sm:$0xff]
    %v679 = vld [vmem:[#allocation7 + $0x780] sm:$0xff]
    %v680 = vld [vmem:[#allocation7 + $0x788] sm:$0xff]
    %v681 = vld [vmem:[#allocation7 + $0x790] sm:$0xff]
    %v682 = vld [vmem:[#allocation7 + $0x798] sm:$0xff]
    %v683 = vld [vmem:[#allocation7 + $0x7a0] sm:$0xff]
    %v684 = vld [vmem:[#allocation7 + $0x7a8] sm:$0xff]
    %v685 = vld [vmem:[#allocation7 + $0x7b0] sm:$0xff]
    %v686 = vld [vmem:[#allocation7 + $0x7b8] sm:$0xff]
    %v687 = vld [vmem:[#allocation7 + $0x7c0] sm:$0xff]
    %v688 = vld [vmem:[#allocation7 + $0x7c8] sm:$0xff]
    %v689 = vld [vmem:[#allocation7 + $0x7d0] sm:$0xff]
    %v690 = vld [vmem:[#allocation7 + $0x7d8] sm:$0xff]
    %v691 = vld [vmem:[#allocation7 + $0x7e0] sm:$0xff]
    %v692 = vld [vmem:[#allocation7 + $0x7e8] sm:$0xff]
    %v693 = vld [vmem:[#allocation7 + $0x7f0] sm:$0xff]
    %v694 = vld [vmem:[#allocation7 + $0x7f8] sm:$0xff]
    %v695 = vld [vmem:[%s4] sm:$0xf]
    %v697 = vlaneseq
    %v698 = vshrl.u32 %v697, 7
    %v699 = vsub.s32 0, %v698
    %v700 = vrot.slane %v695, %v699
    %v701 = vlaneseq
    %v702 = vshrl.u32 %v701, 7
    %v703 = vsub.s32 1, %v702
    %v704 = vrot.slane %v695, %v703
    %v705 = vlaneseq
    %v706 = vshrl.u32 %v705, 7
    %v707 = vsub.s32 2, %v706
    %v708 = vrot.slane %v695, %v707
    %v709 = vlaneseq
    %v710 = vshrl.u32 %v709, 7
    %v711 = vsub.s32 3, %v710
    %v712 = vrot.slane %v695, %v711
    %v973 = vunpack.c.l.b16 %v439
    %v974 = vunpack.c.h.b16 %v439
    %v975 = vunpack.c.l.b16 %v440
    %v976 = vunpack.c.h.b16 %v440
    %v977 = vunpack.c.l.b16 %v441
    %v978 = vunpack.c.h.b16 %v441
    %v979 = vunpack.c.l.b16 %v442
    %v980 = vunpack.c.h.b16 %v442
    %v981 = vunpack.c.l.b16 %v443
    %v982 = vunpack.c.h.b16 %v443
    %v983 = vunpack.c.l.b16 %v444
    %v984 = vunpack.c.h.b16 %v444
    %v985 = vunpack.c.l.b16 %v445
    %v986 = vunpack.c.h.b16 %v445
    %v987 = vunpack.c.l.b16 %v446
    %v988 = vunpack.c.h.b16 %v446
    %v989 = vunpack.c.l.b16 %v447
    %v990 = vunpack.c.h.b16 %v447
    %v991 = vunpack.c.l.b16 %v448
    %v992 = vunpack.c.h.b16 %v448
    %v993 = vunpack.c.l.b16 %v449
    %v994 = vunpack.c.h.b16 %v449
    %v995 = vunpack.c.l.b16 %v450
    %v996 = vunpack.c.h.b16 %v450
    %v997 = vunpack.c.l.b16 %v451
    %v998 = vunpack.c.h.b16 %v451
    %v999 = vunpack.c.l.b16 %v452
    %v1000 = vunpack.c.h.b16 %v452
    %v1001 = vunpack.c.l.b16 %v453
    %v1002 = vunpack.c.h.b16 %v453
    %v1003 = vunpack.c.l.b16 %v454
    %v1004 = vunpack.c.h.b16 %v454
    %v1005 = vunpack.c.l.b16 %v455
    %v1006 = vunpack.c.h.b16 %v455
    %v1007 = vunpack.c.l.b16 %v456
    %v1008 = vunpack.c.h.b16 %v456
    %v1009 = vunpack.c.l.b16 %v457
    %v1010 = vunpack.c.h.b16 %v457
    %v1011 = vunpack.c.l.b16 %v458
    %v1012 = vunpack.c.h.b16 %v458
    %v1013 = vunpack.c.l.b16 %v459
    %v1014 = vunpack.c.h.b16 %v459
    %v1015 = vunpack.c.l.b16 %v460
    %v1016 = vunpack.c.h.b16 %v460
    %v1017 = vunpack.c.l.b16 %v461
    %v1018 = vunpack.c.h.b16 %v461
    %v1019 = vunpack.c.l.b16 %v462
    %v1020 = vunpack.c.h.b16 %v462
    %v1021 = vunpack.c.l.b16 %v463
    %v1022 = vunpack.c.h.b16 %v463
    %v1023 = vunpack.c.l.b16 %v464
    %v1024 = vunpack.c.h.b16 %v464
    %v1025 = vunpack.c.l.b16 %v465
    %v1026 = vunpack.c.h.b16 %v465
    %v1027 = vunpack.c.l.b16 %v466
    %v1028 = vunpack.c.h.b16 %v466
    %v1029 = vunpack.c.l.b16 %v467
    %v1030 = vunpack.c.h.b16 %v467
    %v1031 = vunpack.c.l.b16 %v468
    %v1032 = vunpack.c.h.b16 %v468
    %v1033 = vunpack.c.l.b16 %v469
    %v1034 = vunpack.c.h.b16 %v469
    %v1035 = vunpack.c.l.b16 %v470
    %v1036 = vunpack.c.h.b16 %v470
    %v1037 = vunpack.c.l.b16 %v471
    %v1038 = vunpack.c.h.b16 %v471
    %v1039 = vunpack.c.l.b16 %v472
    %v1040 = vunpack.c.h.b16 %v472
    %v1041 = vunpack.c.l.b16 %v473
    %v1042 = vunpack.c.h.b16 %v473
    %v1043 = vunpack.c.l.b16 %v474
    %v1044 = vunpack.c.h.b16 %v474
    %v1045 = vunpack.c.l.b16 %v475
    %v1046 = vunpack.c.h.b16 %v475
    %v1047 = vunpack.c.l.b16 %v476
    %v1048 = vunpack.c.h.b16 %v476
    %v1049 = vunpack.c.l.b16 %v477
    %v1050 = vunpack.c.h.b16 %v477
    %v1051 = vunpack.c.l.b16 %v478
    %v1052 = vunpack.c.h.b16 %v478
    %v1053 = vunpack.c.l.b16 %v479
    %v1054 = vunpack.c.h.b16 %v479
    %v1055 = vunpack.c.l.b16 %v480
    %v1056 = vunpack.c.h.b16 %v480
    %v1057 = vunpack.c.l.b16 %v481
    %v1058 = vunpack.c.h.b16 %v481
    %v1059 = vunpack.c.l.b16 %v482
    %v1060 = vunpack.c.h.b16 %v482
    %v1061 = vunpack.c.l.b16 %v483
    %v1062 = vunpack.c.h.b16 %v483
    %v1063 = vunpack.c.l.b16 %v484
    %v1064 = vunpack.c.h.b16 %v484
    %v1065 = vunpack.c.l.b16 %v485
    %v1066 = vunpack.c.h.b16 %v485
    %v1067 = vunpack.c.l.b16 %v486
    %v1068 = vunpack.c.h.b16 %v486
    %v1069 = vunpack.c.l.b16 %v487
    %v1070 = vunpack.c.h.b16 %v487
    %v1071 = vunpack.c.l.b16 %v488
    %v1072 = vunpack.c.h.b16 %v488
    %v1073 = vunpack.c.l.b16 %v489
    %v1074 = vunpack.c.h.b16 %v489
    %v1075 = vunpack.c.l.b16 %v490
    %v1076 = vunpack.c.h.b16 %v490
    %v1077 = vunpack.c.l.b16 %v491
    %v1078 = vunpack.c.h.b16 %v491
    %v1079 = vunpack.c.l.b16 %v492
    %v1080 = vunpack.c.h.b16 %v492
    %v1081 = vunpack.c.l.b16 %v493
    %v1082 = vunpack.c.h.b16 %v493
    %v1083 = vunpack.c.l.b16 %v494
    %v1084 = vunpack.c.h.b16 %v494
    %v1085 = vunpack.c.l.b16 %v495
    %v1086 = vunpack.c.h.b16 %v495
    %v1087 = vunpack.c.l.b16 %v496
    %v1088 = vunpack.c.h.b16 %v496
    %v1089 = vunpack.c.l.b16 %v497
    %v1090 = vunpack.c.h.b16 %v497
    %v1091 = vunpack.c.l.b16 %v498
    %v1092 = vunpack.c.h.b16 %v498
    %v1093 = vunpack.c.l.b16 %v499
    %v1094 = vunpack.c.h.b16 %v499
    %v1095 = vunpack.c.l.b16 %v500
    %v1096 = vunpack.c.h.b16 %v500
    %v1097 = vunpack.c.l.b16 %v501
    %v1098 = vunpack.c.h.b16 %v501
    %v1099 = vunpack.c.l.b16 %v502
    %v1100 = vunpack.c.h.b16 %v502
    %v1101 = vunpack.c.l.b16 %v503
    %v1102 = vunpack.c.h.b16 %v503
    %v1103 = vunpack.c.l.b16 %v504
    %v1104 = vunpack.c.h.b16 %v504
    %v1105 = vunpack.c.l.b16 %v505
    %v1106 = vunpack.c.h.b16 %v505
    %v1107 = vunpack.c.l.b16 %v506
    %v1108 = vunpack.c.h.b16 %v506
    %v1109 = vunpack.c.l.b16 %v507
    %v1110 = vunpack.c.h.b16 %v507
    %v1111 = vunpack.c.l.b16 %v508
    %v1112 = vunpack.c.h.b16 %v508
    %v1113 = vunpack.c.l.b16 %v509
    %v1114 = vunpack.c.h.b16 %v509
    %v1115 = vunpack.c.l.b16 %v510
    %v1116 = vunpack.c.h.b16 %v510
    %v1117 = vunpack.c.l.b16 %v511
    %v1118 = vunpack.c.h.b16 %v511
    %v1119 = vunpack.c.l.b16 %v512
    %v1120 = vunpack.c.h.b16 %v512
    %v1121 = vunpack.c.l.b16 %v513
    %v1122 = vunpack.c.h.b16 %v513
    %v1123 = vunpack.c.l.b16 %v514
    %v1124 = vunpack.c.h.b16 %v514
    %v1125 = vunpack.c.l.b16 %v515
    %v1126 = vunpack.c.h.b16 %v515
    %v1127 = vunpack.c.l.b16 %v516
    %v1128 = vunpack.c.h.b16 %v516
    %v1129 = vunpack.c.l.b16 %v517
    %v1130 = vunpack.c.h.b16 %v517
    %v1131 = vunpack.c.l.b16 %v518
    %v1132 = vunpack.c.h.b16 %v518
    %v1133 = vunpack.c.l.b16 %v519
    %v1134 = vunpack.c.h.b16 %v519
    %v1135 = vunpack.c.l.b16 %v520
    %v1136 = vunpack.c.h.b16 %v520
    %v1137 = vunpack.c.l.b16 %v521
    %v1138 = vunpack.c.h.b16 %v521
    %v1139 = vunpack.c.l.b16 %v522
    %v1140 = vunpack.c.h.b16 %v522
    %v1141 = vunpack.c.l.b16 %v523
    %v1142 = vunpack.c.h.b16 %v523
    %v1143 = vunpack.c.l.b16 %v524
    %v1144 = vunpack.c.h.b16 %v524
    %v1145 = vunpack.c.l.b16 %v525
    %v1146 = vunpack.c.h.b16 %v525
    %v1147 = vunpack.c.l.b16 %v526
    %v1148 = vunpack.c.h.b16 %v526
    %v1149 = vunpack.c.l.b16 %v527
    %v1150 = vunpack.c.h.b16 %v527
    %v1151 = vunpack.c.l.b16 %v528
    %v1152 = vunpack.c.h.b16 %v528
    %v1153 = vunpack.c.l.b16 %v529
    %v1154 = vunpack.c.h.b16 %v529
    %v1155 = vunpack.c.l.b16 %v530
    %v1156 = vunpack.c.h.b16 %v530
    %v1157 = vunpack.c.l.b16 %v531
    %v1158 = vunpack.c.h.b16 %v531
    %v1159 = vunpack.c.l.b16 %v532
    %v1160 = vunpack.c.h.b16 %v532
    %v1161 = vunpack.c.l.b16 %v533
    %v1162 = vunpack.c.h.b16 %v533
    %v1163 = vunpack.c.l.b16 %v534
    %v1164 = vunpack.c.h.b16 %v534
    %v1165 = vunpack.c.l.b16 %v535
    %v1166 = vunpack.c.h.b16 %v535
    %v1167 = vunpack.c.l.b16 %v536
    %v1168 = vunpack.c.h.b16 %v536
    %v1169 = vunpack.c.l.b16 %v537
    %v1170 = vunpack.c.h.b16 %v537
    %v1171 = vunpack.c.l.b16 %v538
    %v1172 = vunpack.c.h.b16 %v538
    %v1173 = vunpack.c.l.b16 %v539
    %v1174 = vunpack.c.h.b16 %v539
    %v1175 = vunpack.c.l.b16 %v540
    %v1176 = vunpack.c.h.b16 %v540
    %v1177 = vunpack.c.l.b16 %v541
    %v1178 = vunpack.c.h.b16 %v541
    %v1179 = vunpack.c.l.b16 %v542
    %v1180 = vunpack.c.h.b16 %v542
    %v1181 = vunpack.c.l.b16 %v543
    %v1182 = vunpack.c.h.b16 %v543
    %v1183 = vunpack.c.l.b16 %v544
    %v1184 = vunpack.c.h.b16 %v544
    %v1185 = vunpack.c.l.b16 %v545
    %v1186 = vunpack.c.h.b16 %v545
    %v1187 = vunpack.c.l.b16 %v546
    %v1188 = vunpack.c.h.b16 %v546
    %v1189 = vunpack.c.l.b16 %v547
    %v1190 = vunpack.c.h.b16 %v547
    %v1191 = vunpack.c.l.b16 %v548
    %v1192 = vunpack.c.h.b16 %v548
    %v1193 = vunpack.c.l.b16 %v549
    %v1194 = vunpack.c.h.b16 %v549
    %v1195 = vunpack.c.l.b16 %v550
    %v1196 = vunpack.c.h.b16 %v550
    %v1197 = vunpack.c.l.b16 %v551
    %v1198 = vunpack.c.h.b16 %v551
    %v1199 = vunpack.c.l.b16 %v552
    %v1200 = vunpack.c.h.b16 %v552
    %v1201 = vunpack.c.l.b16 %v553
    %v1202 = vunpack.c.h.b16 %v553
    %v1203 = vunpack.c.l.b16 %v554
    %v1204 = vunpack.c.h.b16 %v554
    %v1205 = vunpack.c.l.b16 %v555
    %v1206 = vunpack.c.h.b16 %v555
    %v1207 = vunpack.c.l.b16 %v556
    %v1208 = vunpack.c.h.b16 %v556
    %v1209 = vunpack.c.l.b16 %v557
    %v1210 = vunpack.c.h.b16 %v557
    %v1211 = vunpack.c.l.b16 %v558
    %v1212 = vunpack.c.h.b16 %v558
    %v1213 = vunpack.c.l.b16 %v559
    %v1214 = vunpack.c.h.b16 %v559
    %v1215 = vunpack.c.l.b16 %v560
    %v1216 = vunpack.c.h.b16 %v560
    %v1217 = vunpack.c.l.b16 %v561
    %v1218 = vunpack.c.h.b16 %v561
    %v1219 = vunpack.c.l.b16 %v562
    %v1220 = vunpack.c.h.b16 %v562
    %v1221 = vunpack.c.l.b16 %v563
    %v1222 = vunpack.c.h.b16 %v563
    %v1223 = vunpack.c.l.b16 %v564
    %v1224 = vunpack.c.h.b16 %v564
    %v1225 = vunpack.c.l.b16 %v565
    %v1226 = vunpack.c.h.b16 %v565
    %v1227 = vunpack.c.l.b16 %v566
    %v1228 = vunpack.c.h.b16 %v566
    %v1229 = vunpack.c.l.b16 %v567
    %v1230 = vunpack.c.h.b16 %v567
    %v1231 = vunpack.c.l.b16 %v568
    %v1232 = vunpack.c.h.b16 %v568
    %v1233 = vunpack.c.l.b16 %v569
    %v1234 = vunpack.c.h.b16 %v569
    %v1235 = vunpack.c.l.b16 %v570
    %v1236 = vunpack.c.h.b16 %v570
    %v1237 = vunpack.c.l.b16 %v571
    %v1238 = vunpack.c.h.b16 %v571
    %v1239 = vunpack.c.l.b16 %v572
    %v1240 = vunpack.c.h.b16 %v572
    %v1241 = vunpack.c.l.b16 %v573
    %v1242 = vunpack.c.h.b16 %v573
    %v1243 = vunpack.c.l.b16 %v574
    %v1244 = vunpack.c.h.b16 %v574
    %v1245 = vunpack.c.l.b16 %v575
    %v1246 = vunpack.c.h.b16 %v575
    %v1247 = vunpack.c.l.b16 %v576
    %v1248 = vunpack.c.h.b16 %v576
    %v1249 = vunpack.c.l.b16 %v577
    %v1250 = vunpack.c.h.b16 %v577
    %v1251 = vunpack.c.l.b16 %v578
    %v1252 = vunpack.c.h.b16 %v578
    %v1253 = vunpack.c.l.b16 %v579
    %v1254 = vunpack.c.h.b16 %v579
    %v1255 = vunpack.c.l.b16 %v580
    %v1256 = vunpack.c.h.b16 %v580
    %v1257 = vunpack.c.l.b16 %v581
    %v1258 = vunpack.c.h.b16 %v581
    %v1259 = vunpack.c.l.b16 %v582
    %v1260 = vunpack.c.h.b16 %v582
    %v1261 = vunpack.c.l.b16 %v583
    %v1262 = vunpack.c.h.b16 %v583
    %v1263 = vunpack.c.l.b16 %v584
    %v1264 = vunpack.c.h.b16 %v584
    %v1265 = vunpack.c.l.b16 %v585
    %v1266 = vunpack.c.h.b16 %v585
    %v1267 = vunpack.c.l.b16 %v586
    %v1268 = vunpack.c.h.b16 %v586
    %v1269 = vunpack.c.l.b16 %v587
    %v1270 = vunpack.c.h.b16 %v587
    %v1271 = vunpack.c.l.b16 %v588
    %v1272 = vunpack.c.h.b16 %v588
    %v1273 = vunpack.c.l.b16 %v589
    %v1274 = vunpack.c.h.b16 %v589
    %v1275 = vunpack.c.l.b16 %v590
    %v1276 = vunpack.c.h.b16 %v590
    %v1277 = vunpack.c.l.b16 %v591
    %v1278 = vunpack.c.h.b16 %v591
    %v1279 = vunpack.c.l.b16 %v592
    %v1280 = vunpack.c.h.b16 %v592
    %v1281 = vunpack.c.l.b16 %v593
    %v1282 = vunpack.c.h.b16 %v593
    %v1283 = vunpack.c.l.b16 %v594
    %v1284 = vunpack.c.h.b16 %v594
    %v1285 = vunpack.c.l.b16 %v595
    %v1286 = vunpack.c.h.b16 %v595
    %v1287 = vunpack.c.l.b16 %v596
    %v1288 = vunpack.c.h.b16 %v596
    %v1289 = vunpack.c.l.b16 %v597
    %v1290 = vunpack.c.h.b16 %v597
    %v1291 = vunpack.c.l.b16 %v598
    %v1292 = vunpack.c.h.b16 %v598
    %v1293 = vunpack.c.l.b16 %v599
    %v1294 = vunpack.c.h.b16 %v599
    %v1295 = vunpack.c.l.b16 %v600
    %v1296 = vunpack.c.h.b16 %v600
    %v1297 = vunpack.c.l.b16 %v601
    %v1298 = vunpack.c.h.b16 %v601
    %v1299 = vunpack.c.l.b16 %v602
    %v1300 = vunpack.c.h.b16 %v602
    %v1301 = vunpack.c.l.b16 %v603
    %v1302 = vunpack.c.h.b16 %v603
    %v1303 = vunpack.c.l.b16 %v604
    %v1304 = vunpack.c.h.b16 %v604
    %v1305 = vunpack.c.l.b16 %v605
    %v1306 = vunpack.c.h.b16 %v605
    %v1307 = vunpack.c.l.b16 %v606
    %v1308 = vunpack.c.h.b16 %v606
    %v1309 = vunpack.c.l.b16 %v607
    %v1310 = vunpack.c.h.b16 %v607
    %v1311 = vunpack.c.l.b16 %v608
    %v1312 = vunpack.c.h.b16 %v608
    %v1313 = vunpack.c.l.b16 %v609
    %v1314 = vunpack.c.h.b16 %v609
    %v1315 = vunpack.c.l.b16 %v610
    %v1316 = vunpack.c.h.b16 %v610
    %v1317 = vunpack.c.l.b16 %v611
    %v1318 = vunpack.c.h.b16 %v611
    %v1319 = vunpack.c.l.b16 %v612
    %v1320 = vunpack.c.h.b16 %v612
    %v1321 = vunpack.c.l.b16 %v613
    %v1322 = vunpack.c.h.b16 %v613
    %v1323 = vunpack.c.l.b16 %v614
    %v1324 = vunpack.c.h.b16 %v614
    %v1325 = vunpack.c.l.b16 %v615
    %v1326 = vunpack.c.h.b16 %v615
    %v1327 = vunpack.c.l.b16 %v616
    %v1328 = vunpack.c.h.b16 %v616
    %v1329 = vunpack.c.l.b16 %v617
    %v1330 = vunpack.c.h.b16 %v617
    %v1331 = vunpack.c.l.b16 %v618
    %v1332 = vunpack.c.h.b16 %v618
    %v1333 = vunpack.c.l.b16 %v619
    %v1334 = vunpack.c.h.b16 %v619
    %v1335 = vunpack.c.l.b16 %v620
    %v1336 = vunpack.c.h.b16 %v620
    %v1337 = vunpack.c.l.b16 %v621
    %v1338 = vunpack.c.h.b16 %v621
    %v1339 = vunpack.c.l.b16 %v622
    %v1340 = vunpack.c.h.b16 %v622
    %v1341 = vunpack.c.l.b16 %v623
    %v1342 = vunpack.c.h.b16 %v623
    %v1343 = vunpack.c.l.b16 %v624
    %v1344 = vunpack.c.h.b16 %v624
    %v1345 = vunpack.c.l.b16 %v625
    %v1346 = vunpack.c.h.b16 %v625
    %v1347 = vunpack.c.l.b16 %v626
    %v1348 = vunpack.c.h.b16 %v626
    %v1349 = vunpack.c.l.b16 %v627
    %v1350 = vunpack.c.h.b16 %v627
    %v1351 = vunpack.c.l.b16 %v628
    %v1352 = vunpack.c.h.b16 %v628
    %v1353 = vunpack.c.l.b16 %v629
    %v1354 = vunpack.c.h.b16 %v629
    %v1355 = vunpack.c.l.b16 %v630
    %v1356 = vunpack.c.h.b16 %v630
    %v1357 = vunpack.c.l.b16 %v631
    %v1358 = vunpack.c.h.b16 %v631
    %v1359 = vunpack.c.l.b16 %v632
    %v1360 = vunpack.c.h.b16 %v632
    %v1361 = vunpack.c.l.b16 %v633
    %v1362 = vunpack.c.h.b16 %v633
    %v1363 = vunpack.c.l.b16 %v634
    %v1364 = vunpack.c.h.b16 %v634
    %v1365 = vunpack.c.l.b16 %v635
    %v1366 = vunpack.c.h.b16 %v635
    %v1367 = vunpack.c.l.b16 %v636
    %v1368 = vunpack.c.h.b16 %v636
    %v1369 = vunpack.c.l.b16 %v637
    %v1370 = vunpack.c.h.b16 %v637
    %v1371 = vunpack.c.l.b16 %v638
    %v1372 = vunpack.c.h.b16 %v638
    %v1373 = vunpack.c.l.b16 %v639
    %v1374 = vunpack.c.h.b16 %v639
    %v1375 = vunpack.c.l.b16 %v640
    %v1376 = vunpack.c.h.b16 %v640
    %v1377 = vunpack.c.l.b16 %v641
    %v1378 = vunpack.c.h.b16 %v641
    %v1379 = vunpack.c.l.b16 %v642
    %v1380 = vunpack.c.h.b16 %v642
    %v1381 = vunpack.c.l.b16 %v643
    %v1382 = vunpack.c.h.b16 %v643
    %v1383 = vunpack.c.l.b16 %v644
    %v1384 = vunpack.c.h.b16 %v644
    %v1385 = vunpack.c.l.b16 %v645
    %v1386 = vunpack.c.h.b16 %v645
    %v1387 = vunpack.c.l.b16 %v646
    %v1388 = vunpack.c.h.b16 %v646
    %v1389 = vunpack.c.l.b16 %v647
    %v1390 = vunpack.c.h.b16 %v647
    %v1391 = vunpack.c.l.b16 %v648
    %v1392 = vunpack.c.h.b16 %v648
    %v1393 = vunpack.c.l.b16 %v649
    %v1394 = vunpack.c.h.b16 %v649
    %v1395 = vunpack.c.l.b16 %v650
    %v1396 = vunpack.c.h.b16 %v650
    %v1397 = vunpack.c.l.b16 %v651
    %v1398 = vunpack.c.h.b16 %v651
    %v1399 = vunpack.c.l.b16 %v652
    %v1400 = vunpack.c.h.b16 %v652
    %v1401 = vunpack.c.l.b16 %v653
    %v1402 = vunpack.c.h.b16 %v653
    %v1403 = vunpack.c.l.b16 %v654
    %v1404 = vunpack.c.h.b16 %v654
    %v1405 = vunpack.c.l.b16 %v655
    %v1406 = vunpack.c.h.b16 %v655
    %v1407 = vunpack.c.l.b16 %v656
    %v1408 = vunpack.c.h.b16 %v656
    %v1409 = vunpack.c.l.b16 %v657
    %v1410 = vunpack.c.h.b16 %v657
    %v1411 = vunpack.c.l.b16 %v658
    %v1412 = vunpack.c.h.b16 %v658
    %v1413 = vunpack.c.l.b16 %v659
    %v1414 = vunpack.c.h.b16 %v659
    %v1415 = vunpack.c.l.b16 %v660
    %v1416 = vunpack.c.h.b16 %v660
    %v1417 = vunpack.c.l.b16 %v661
    %v1418 = vunpack.c.h.b16 %v661
    %v1419 = vunpack.c.l.b16 %v662
    %v1420 = vunpack.c.h.b16 %v662
    %v1421 = vunpack.c.l.b16 %v663
    %v1422 = vunpack.c.h.b16 %v663
    %v1423 = vunpack.c.l.b16 %v664
    %v1424 = vunpack.c.h.b16 %v664
    %v1425 = vunpack.c.l.b16 %v665
    %v1426 = vunpack.c.h.b16 %v665
    %v1427 = vunpack.c.l.b16 %v666
    %v1428 = vunpack.c.h.b16 %v666
    %v1429 = vunpack.c.l.b16 %v667
    %v1430 = vunpack.c.h.b16 %v667
    %v1431 = vunpack.c.l.b16 %v668
    %v1432 = vunpack.c.h.b16 %v668
    %v1433 = vunpack.c.l.b16 %v669
    %v1434 = vunpack.c.h.b16 %v669
    %v1435 = vunpack.c.l.b16 %v670
    %v1436 = vunpack.c.h.b16 %v670
    %v1437 = vunpack.c.l.b16 %v671
    %v1438 = vunpack.c.h.b16 %v671
    %v1439 = vunpack.c.l.b16 %v672
    %v1440 = vunpack.c.h.b16 %v672
    %v1441 = vunpack.c.l.b16 %v673
    %v1442 = vunpack.c.h.b16 %v673
    %v1443 = vunpack.c.l.b16 %v674
    %v1444 = vunpack.c.h.b16 %v674
    %v1445 = vunpack.c.l.b16 %v675
    %v1446 = vunpack.c.h.b16 %v675
    %v1447 = vunpack.c.l.b16 %v676
    %v1448 = vunpack.c.h.b16 %v676
    %v1449 = vunpack.c.l.b16 %v677
    %v1450 = vunpack.c.h.b16 %v677
    %v1451 = vunpack.c.l.b16 %v678
    %v1452 = vunpack.c.h.b16 %v678
    %v1453 = vunpack.c.l.b16 %v679
    %v1454 = vunpack.c.h.b16 %v679
    %v1455 = vunpack.c.l.b16 %v680
    %v1456 = vunpack.c.h.b16 %v680
    %v1457 = vunpack.c.l.b16 %v681
    %v1458 = vunpack.c.h.b16 %v681
    %v1459 = vunpack.c.l.b16 %v682
    %v1460 = vunpack.c.h.b16 %v682
    %v1461 = vunpack.c.l.b16 %v683
    %v1462 = vunpack.c.h.b16 %v683
    %v1463 = vunpack.c.l.b16 %v684
    %v1464 = vunpack.c.h.b16 %v684
    %v1465 = vunpack.c.l.b16 %v685
    %v1466 = vunpack.c.h.b16 %v685
    %v1467 = vunpack.c.l.b16 %v686
    %v1468 = vunpack.c.h.b16 %v686
    %v1469 = vunpack.c.l.b16 %v687
    %v1470 = vunpack.c.h.b16 %v687
    %v1471 = vunpack.c.l.b16 %v688
    %v1472 = vunpack.c.h.b16 %v688
    %v1473 = vunpack.c.l.b16 %v689
    %v1474 = vunpack.c.h.b16 %v689
    %v1475 = vunpack.c.l.b16 %v690
    %v1476 = vunpack.c.h.b16 %v690
    %v1477 = vunpack.c.l.b16 %v691
    %v1478 = vunpack.c.h.b16 %v691
    %v1479 = vunpack.c.l.b16 %v692
    %v1480 = vunpack.c.h.b16 %v692
    %v1481 = vunpack.c.l.b16 %v693
    %v1482 = vunpack.c.h.b16 %v693
    %v1483 = vunpack.c.l.b16 %v694
    %v1484 = vunpack.c.h.b16 %v694
    %v1485 = vpack.c.b16 %v977, %v973
    %v1486 = vpack.c.b16 %v978, %v974
    %v1487 = vpack.c.b16 %v979, %v975
    %v1488 = vpack.c.b16 %v980, %v976
    %v1489 = vpack.c.b16 %v985, %v981
    %v1490 = vpack.c.b16 %v986, %v982
    %v1491 = vpack.c.b16 %v987, %v983
    %v1492 = vpack.c.b16 %v988, %v984
    %v1493 = vpack.c.b16 %v993, %v989
    %v1494 = vpack.c.b16 %v994, %v990
    %v1495 = vpack.c.b16 %v995, %v991
    %v1496 = vpack.c.b16 %v996, %v992
    %v1497 = vpack.c.b16 %v1001, %v997
    %v1498 = vpack.c.b16 %v1002, %v998
    %v1499 = vpack.c.b16 %v1003, %v999
    %v1500 = vpack.c.b16 %v1004, %v1000
    %v1501 = vpack.c.b16 %v1009, %v1005
    %v1502 = vpack.c.b16 %v1010, %v1006
    %v1503 = vpack.c.b16 %v1011, %v1007
    %v1504 = vpack.c.b16 %v1012, %v1008
    %v1505 = vpack.c.b16 %v1017, %v1013
    %v1506 = vpack.c.b16 %v1018, %v1014
    %v1507 = vpack.c.b16 %v1019, %v1015
    %v1508 = vpack.c.b16 %v1020, %v1016
    %v1509 = vpack.c.b16 %v1025, %v1021
    %v1510 = vpack.c.b16 %v1026, %v1022
    %v1511 = vpack.c.b16 %v1027, %v1023
    %v1512 = vpack.c.b16 %v1028, %v1024
    %v1513 = vpack.c.b16 %v1033, %v1029
    %v1514 = vpack.c.b16 %v1034, %v1030
    %v1515 = vpack.c.b16 %v1035, %v1031
    %v1516 = vpack.c.b16 %v1036, %v1032
    %v1517 = vpack.c.b16 %v1041, %v1037
    %v1518 = vpack.c.b16 %v1042, %v1038
    %v1519 = vpack.c.b16 %v1043, %v1039
    %v1520 = vpack.c.b16 %v1044, %v1040
    %v1521 = vpack.c.b16 %v1049, %v1045
    %v1522 = vpack.c.b16 %v1050, %v1046
    %v1523 = vpack.c.b16 %v1051, %v1047
    %v1524 = vpack.c.b16 %v1052, %v1048
    %v1525 = vpack.c.b16 %v1057, %v1053
    %v1526 = vpack.c.b16 %v1058, %v1054
    %v1527 = vpack.c.b16 %v1059, %v1055
    %v1528 = vpack.c.b16 %v1060, %v1056
    %v1529 = vpack.c.b16 %v1065, %v1061
    %v1530 = vpack.c.b16 %v1066, %v1062
    %v1531 = vpack.c.b16 %v1067, %v1063
    %v1532 = vpack.c.b16 %v1068, %v1064
    %v1533 = vpack.c.b16 %v1073, %v1069
    %v1534 = vpack.c.b16 %v1074, %v1070
    %v1535 = vpack.c.b16 %v1075, %v1071
    %v1536 = vpack.c.b16 %v1076, %v1072
    %v1537 = vpack.c.b16 %v1081, %v1077
    %v1538 = vpack.c.b16 %v1082, %v1078
    %v1539 = vpack.c.b16 %v1083, %v1079
    %v1540 = vpack.c.b16 %v1084, %v1080
    %v1541 = vpack.c.b16 %v1089, %v1085
    %v1542 = vpack.c.b16 %v1090, %v1086
    %v1543 = vpack.c.b16 %v1091, %v1087
    %v1544 = vpack.c.b16 %v1092, %v1088
    %v1545 = vpack.c.b16 %v1097, %v1093
    %v1546 = vpack.c.b16 %v1098, %v1094
    %v1547 = vpack.c.b16 %v1099, %v1095
    %v1548 = vpack.c.b16 %v1100, %v1096
    %v1549 = vpack.c.b16 %v1105, %v1101
    %v1550 = vpack.c.b16 %v1106, %v1102
    %v1551 = vpack.c.b16 %v1107, %v1103
    %v1552 = vpack.c.b16 %v1108, %v1104
    %v1553 = vpack.c.b16 %v1113, %v1109
    %v1554 = vpack.c.b16 %v1114, %v1110
    %v1555 = vpack.c.b16 %v1115, %v1111
    %v1556 = vpack.c.b16 %v1116, %v1112
    %v1557 = vpack.c.b16 %v1121, %v1117
    %v1558 = vpack.c.b16 %v1122, %v1118
    %v1559 = vpack.c.b16 %v1123, %v1119
    %v1560 = vpack.c.b16 %v1124, %v1120
    %v1561 = vpack.c.b16 %v1129, %v1125
    %v1562 = vpack.c.b16 %v1130, %v1126
    %v1563 = vpack.c.b16 %v1131, %v1127
    %v1564 = vpack.c.b16 %v1132, %v1128
    %v1565 = vpack.c.b16 %v1137, %v1133
    %v1566 = vpack.c.b16 %v1138, %v1134
    %v1567 = vpack.c.b16 %v1139, %v1135
    %v1568 = vpack.c.b16 %v1140, %v1136
    %v1569 = vpack.c.b16 %v1145, %v1141
    %v1570 = vpack.c.b16 %v1146, %v1142
    %v1571 = vpack.c.b16 %v1147, %v1143
    %v1572 = vpack.c.b16 %v1148, %v1144
    %v1573 = vpack.c.b16 %v1153, %v1149
    %v1574 = vpack.c.b16 %v1154, %v1150
    %v1575 = vpack.c.b16 %v1155, %v1151
    %v1576 = vpack.c.b16 %v1156, %v1152
    %v1577 = vpack.c.b16 %v1161, %v1157
    %v1578 = vpack.c.b16 %v1162, %v1158
    %v1579 = vpack.c.b16 %v1163, %v1159
    %v1580 = vpack.c.b16 %v1164, %v1160
    %v1581 = vpack.c.b16 %v1169, %v1165
    %v1582 = vpack.c.b16 %v1170, %v1166
    %v1583 = vpack.c.b16 %v1171, %v1167
    %v1584 = vpack.c.b16 %v1172, %v1168
    %v1585 = vpack.c.b16 %v1177, %v1173
    %v1586 = vpack.c.b16 %v1178, %v1174
    %v1587 = vpack.c.b16 %v1179, %v1175
    %v1588 = vpack.c.b16 %v1180, %v1176
    %v1589 = vpack.c.b16 %v1185, %v1181
    %v1590 = vpack.c.b16 %v1186, %v1182
    %v1591 = vpack.c.b16 %v1187, %v1183
    %v1592 = vpack.c.b16 %v1188, %v1184
    %v1593 = vpack.c.b16 %v1193, %v1189
    %v1594 = vpack.c.b16 %v1194, %v1190
    %v1595 = vpack.c.b16 %v1195, %v1191
    %v1596 = vpack.c.b16 %v1196, %v1192
    %v1597 = vpack.c.b16 %v1201, %v1197
    %v1598 = vpack.c.b16 %v1202, %v1198
    %v1599 = vpack.c.b16 %v1203, %v1199
    %v1600 = vpack.c.b16 %v1204, %v1200
    %v1601 = vpack.c.b16 %v1209, %v1205
    %v1602 = vpack.c.b16 %v1210, %v1206
    %v1603 = vpack.c.b16 %v1211, %v1207
    %v1604 = vpack.c.b16 %v1212, %v1208
    %v1605 = vpack.c.b16 %v1217, %v1213
    %v1606 = vpack.c.b16 %v1218, %v1214
    %v1607 = vpack.c.b16 %v1219, %v1215
    %v1608 = vpack.c.b16 %v1220, %v1216
    %v1609 = vpack.c.b16 %v1225, %v1221
    %v1610 = vpack.c.b16 %v1226, %v1222
    %v1611 = vpack.c.b16 %v1227, %v1223
    %v1612 = vpack.c.b16 %v1228, %v1224
    %v1613 = vpack.c.b16 %v1233, %v1229
    %v1614 = vpack.c.b16 %v1234, %v1230
    %v1615 = vpack.c.b16 %v1235, %v1231
    %v1616 = vpack.c.b16 %v1236, %v1232
    %v1617 = vpack.c.b16 %v1241, %v1237
    %v1618 = vpack.c.b16 %v1242, %v1238
    %v1619 = vpack.c.b16 %v1243, %v1239
    %v1620 = vpack.c.b16 %v1244, %v1240
    %v1621 = vpack.c.b16 %v1249, %v1245
    %v1622 = vpack.c.b16 %v1250, %v1246
    %v1623 = vpack.c.b16 %v1251, %v1247
    %v1624 = vpack.c.b16 %v1252, %v1248
    %v1625 = vpack.c.b16 %v1257, %v1253
    %v1626 = vpack.c.b16 %v1258, %v1254
    %v1627 = vpack.c.b16 %v1259, %v1255
    %v1628 = vpack.c.b16 %v1260, %v1256
    %v1629 = vpack.c.b16 %v1265, %v1261
    %v1630 = vpack.c.b16 %v1266, %v1262
    %v1631 = vpack.c.b16 %v1267, %v1263
    %v1632 = vpack.c.b16 %v1268, %v1264
    %v1633 = vpack.c.b16 %v1273, %v1269
    %v1634 = vpack.c.b16 %v1274, %v1270
    %v1635 = vpack.c.b16 %v1275, %v1271
    %v1636 = vpack.c.b16 %v1276, %v1272
    %v1637 = vpack.c.b16 %v1281, %v1277
    %v1638 = vpack.c.b16 %v1282, %v1278
    %v1639 = vpack.c.b16 %v1283, %v1279
    %v1640 = vpack.c.b16 %v1284, %v1280
    %v1641 = vpack.c.b16 %v1289, %v1285
    %v1642 = vpack.c.b16 %v1290, %v1286
    %v1643 = vpack.c.b16 %v1291, %v1287
    %v1644 = vpack.c.b16 %v1292, %v1288
    %v1645 = vpack.c.b16 %v1297, %v1293
    %v1646 = vpack.c.b16 %v1298, %v1294
    %v1647 = vpack.c.b16 %v1299, %v1295
    %v1648 = vpack.c.b16 %v1300, %v1296
    %v1649 = vpack.c.b16 %v1305, %v1301
    %v1650 = vpack.c.b16 %v1306, %v1302
    %v1651 = vpack.c.b16 %v1307, %v1303
    %v1652 = vpack.c.b16 %v1308, %v1304
    %v1653 = vpack.c.b16 %v1313, %v1309
    %v1654 = vpack.c.b16 %v1314, %v1310
    %v1655 = vpack.c.b16 %v1315, %v1311
    %v1656 = vpack.c.b16 %v1316, %v1312
    %v1657 = vpack.c.b16 %v1321, %v1317
    %v1658 = vpack.c.b16 %v1322, %v1318
    %v1659 = vpack.c.b16 %v1323, %v1319
    %v1660 = vpack.c.b16 %v1324, %v1320
    %v1661 = vpack.c.b16 %v1329, %v1325
    %v1662 = vpack.c.b16 %v1330, %v1326
    %v1663 = vpack.c.b16 %v1331, %v1327
    %v1664 = vpack.c.b16 %v1332, %v1328
    %v1665 = vpack.c.b16 %v1337, %v1333
    %v1666 = vpack.c.b16 %v1338, %v1334
    %v1667 = vpack.c.b16 %v1339, %v1335
    %v1668 = vpack.c.b16 %v1340, %v1336
    %v1669 = vpack.c.b16 %v1345, %v1341
    %v1670 = vpack.c.b16 %v1346, %v1342
    %v1671 = vpack.c.b16 %v1347, %v1343
    %v1672 = vpack.c.b16 %v1348, %v1344
    %v1673 = vpack.c.b16 %v1353, %v1349
    %v1674 = vpack.c.b16 %v1354, %v1350
    %v1675 = vpack.c.b16 %v1355, %v1351
    %v1676 = vpack.c.b16 %v1356, %v1352
    %v1677 = vpack.c.b16 %v1361, %v1357
    %v1678 = vpack.c.b16 %v1362, %v1358
    %v1679 = vpack.c.b16 %v1363, %v1359
    %v1680 = vpack.c.b16 %v1364, %v1360
    %v1681 = vpack.c.b16 %v1369, %v1365
    %v1682 = vpack.c.b16 %v1370, %v1366
    %v1683 = vpack.c.b16 %v1371, %v1367
    %v1684 = vpack.c.b16 %v1372, %v1368
    %v1685 = vpack.c.b16 %v1377, %v1373
    %v1686 = vpack.c.b16 %v1378, %v1374
    %v1687 = vpack.c.b16 %v1379, %v1375
    %v1688 = vpack.c.b16 %v1380, %v1376
    %v1689 = vpack.c.b16 %v1385, %v1381
    %v1690 = vpack.c.b16 %v1386, %v1382
    %v1691 = vpack.c.b16 %v1387, %v1383
    %v1692 = vpack.c.b16 %v1388, %v1384
    %v1693 = vpack.c.b16 %v1393, %v1389
    %v1694 = vpack.c.b16 %v1394, %v1390
    %v1695 = vpack.c.b16 %v1395, %v1391
    %v1696 = vpack.c.b16 %v1396, %v1392
    %v1697 = vpack.c.b16 %v1401, %v1397
    %v1698 = vpack.c.b16 %v1402, %v1398
    %v1699 = vpack.c.b16 %v1403, %v1399
    %v1700 = vpack.c.b16 %v1404, %v1400
    %v1701 = vpack.c.b16 %v1409, %v1405
    %v1702 = vpack.c.b16 %v1410, %v1406
    %v1703 = vpack.c.b16 %v1411, %v1407
    %v1704 = vpack.c.b16 %v1412, %v1408
    %v1705 = vpack.c.b16 %v1417, %v1413
    %v1706 = vpack.c.b16 %v1418, %v1414
    %v1707 = vpack.c.b16 %v1419, %v1415
    %v1708 = vpack.c.b16 %v1420, %v1416
    %v1709 = vpack.c.b16 %v1425, %v1421
    %v1710 = vpack.c.b16 %v1426, %v1422
    %v1711 = vpack.c.b16 %v1427, %v1423
    %v1712 = vpack.c.b16 %v1428, %v1424
    %v1713 = vpack.c.b16 %v1433, %v1429
    %v1714 = vpack.c.b16 %v1434, %v1430
    %v1715 = vpack.c.b16 %v1435, %v1431
    %v1716 = vpack.c.b16 %v1436, %v1432
    %v1717 = vpack.c.b16 %v1441, %v1437
    %v1718 = vpack.c.b16 %v1442, %v1438
    %v1719 = vpack.c.b16 %v1443, %v1439
    %v1720 = vpack.c.b16 %v1444, %v1440
    %v1721 = vpack.c.b16 %v1449, %v1445
    %v1722 = vpack.c.b16 %v1450, %v1446
    %v1723 = vpack.c.b16 %v1451, %v1447
    %v1724 = vpack.c.b16 %v1452, %v1448
    %v1725 = vpack.c.b16 %v1457, %v1453
    %v1726 = vpack.c.b16 %v1458, %v1454
    %v1727 = vpack.c.b16 %v1459, %v1455
    %v1728 = vpack.c.b16 %v1460, %v1456
    %v1729 = vpack.c.b16 %v1465, %v1461
    %v1730 = vpack.c.b16 %v1466, %v1462
    %v1731 = vpack.c.b16 %v1467, %v1463
    %v1732 = vpack.c.b16 %v1468, %v1464
    %v1733 = vpack.c.b16 %v1473, %v1469
    %v1734 = vpack.c.b16 %v1474, %v1470
    %v1735 = vpack.c.b16 %v1475, %v1471
    %v1736 = vpack.c.b16 %v1476, %v1472
    %v1737 = vpack.c.b16 %v1481, %v1477
    %v1738 = vpack.c.b16 %v1482, %v1478
    %v1739 = vpack.c.b16 %v1483, %v1479
    %v1740 = vpack.c.b16 %v1484, %v1480
    %1997 = vmatprep.subr.bf16.mxu0 %v1486
    %1998 = vmatpush1.bf16.msra.mxu0 %v1485
    %1999 = vmatprep.subr.bf16.mxu0 %v1490
    %2000 = vmatpush1.bf16.msra.mxu0 %v1489
    %2001 = vmatprep.subr.bf16.mxu0 %v1494
    %2002 = vmatpush1.bf16.msra.mxu0 %v1493
    %2003 = vmatprep.subr.bf16.mxu0 %v1498
    %2004 = vmatpush1.bf16.msra.mxu0 %v1497
    %2005 = vmatprep.subr.bf16.mxu0 %v1502
    %2006 = vmatpush1.bf16.msra.mxu0 %v1501
    %2007 = vmatprep.subr.bf16.mxu0 %v1506
    %2008 = vmatpush1.bf16.msra.mxu0 %v1505
    %2009 = vmatprep.subr.bf16.mxu0 %v1510
    %2010 = vmatpush1.bf16.msra.mxu0 %v1509
    %2011 = vmatprep.subr.bf16.mxu0 %v1514
    %2012 = vmatpush1.bf16.msra.mxu0 %v1513
    %2013 = vmatprep.subr.bf16.mxu0 %v1518
    %2014 = vmatpush1.bf16.msra.mxu0 %v1517
    %2015 = vmatprep.subr.bf16.mxu0 %v1522
    %2016 = vmatpush1.bf16.msra.mxu0 %v1521
    %2017 = vmatprep.subr.bf16.mxu0 %v1526
    %2018 = vmatpush1.bf16.msra.mxu0 %v1525
    %2019 = vmatprep.subr.bf16.mxu0 %v1530
    %2020 = vmatpush1.bf16.msra.mxu0 %v1529
    %2021 = vmatprep.subr.bf16.mxu0 %v1534
    %2022 = vmatpush1.bf16.msra.mxu0 %v1533
    %2023 = vmatprep.subr.bf16.mxu0 %v1538
    %2024 = vmatpush1.bf16.msra.mxu0 %v1537
    %2025 = vmatprep.subr.bf16.mxu0 %v1542
    %2026 = vmatpush1.bf16.msra.mxu0 %v1541
    %2027 = vmatprep.subr.bf16.mxu0 %v1546
    %2028 = vmatpush1.bf16.msra.mxu0 %v1545
    %2029 = vmatprep.mubr.bf16.mxu0 %v432
    %2030 = vmatmul.mubr.bf16.gmra.mrb[0].mxu0 %v431
    %v2031 = vpop.f32.mrb[0].mxu0
    %v2032 = vadd.f32 %v700, %v2031
    %v2033 = vpop.f32.mrb[0].mxu0
    %v2034 = vadd.f32 %v704, %v2033
    %v2035 = vpop.f32.mrb[0].mxu0
    %v2036 = vpop.f32.mrb[0].mxu0
    %2037 = vdwg.mxu0
    %2038 = vmatprep.subr.bf16.mxu0 %v1550
    %2039 = vmatpush1.bf16.msra.mxu0 %v1549
    %2040 = vmatprep.subr.bf16.mxu0 %v1554
    %2041 = vmatpush1.bf16.msra.mxu0 %v1553
    %2042 = vmatprep.subr.bf16.mxu0 %v1558
    %2043 = vmatpush1.bf16.msra.mxu0 %v1557
    %2044 = vmatprep.subr.bf16.mxu0 %v1562
    %2045 = vmatpush1.bf16.msra.mxu0 %v1561
    %2046 = vmatprep.subr.bf16.mxu0 %v1566
    %2047 = vmatpush1.bf16.msra.mxu0 %v1565
    %2048 = vmatprep.subr.bf16.mxu0 %v1570
    %2049 = vmatpush1.bf16.msra.mxu0 %v1569
    %2050 = vmatprep.subr.bf16.mxu0 %v1574
    %2051 = vmatpush1.bf16.msra.mxu0 %v1573
    %2052 = vmatprep.subr.bf16.mxu0 %v1578
    %2053 = vmatpush1.bf16.msra.mxu0 %v1577
    %2054 = vmatprep.subr.bf16.mxu0 %v1582
    %2055 = vmatpush1.bf16.msra.mxu0 %v1581
    %2056 = vmatprep.subr.bf16.mxu0 %v1586
    %2057 = vmatpush1.bf16.msra.mxu0 %v1585
    %2058 = vmatprep.subr.bf16.mxu0 %v1590
    %2059 = vmatpush1.bf16.msra.mxu0 %v1589
    %2060 = vmatprep.subr.bf16.mxu0 %v1594
    %2061 = vmatpush1.bf16.msra.mxu0 %v1593
    %2062 = vmatprep.subr.bf16.mxu0 %v1598
    %2063 = vmatpush1.bf16.msra.mxu0 %v1597
    %2064 = vmatprep.subr.bf16.mxu0 %v1602
    %2065 = vmatpush1.bf16.msra.mxu0 %v1601
    %2066 = vmatprep.subr.bf16.mxu0 %v1606
    %2067 = vmatpush1.bf16.msra.mxu0 %v1605
    %2068 = vmatprep.subr.bf16.mxu0 %v1610
    %2069 = vmatpush1.bf16.msra.mxu0 %v1609
    %2070 = vmatprep.mubr.bf16.mxu0 %v434
    %2071 = vmatmul.mubr.bf16.gmra.mrb[0].mxu0 %v433
    %v2072 = vpop.f32.mrb[0].mxu0
    %v2073 = vadd.f32 %v2032, %v2072
    %v2074 = vpop.f32.mrb[0].mxu0
    %v2075 = vadd.f32 %v2034, %v2074
    %v2076 = vpop.f32.mrb[0].mxu0
    %v2077 = vpop.f32.mrb[0].mxu0
    %2078 = vdwg.mxu0
    %2079 = vmatprep.subr.bf16.mxu0 %v1614
    %2080 = vmatpush1.bf16.msra.mxu0 %v1613
    %2081 = vmatprep.subr.bf16.mxu0 %v1618
    %2082 = vmatpush1.bf16.msra.mxu0 %v1617
    %2083 = vmatprep.subr.bf16.mxu0 %v1622
    %2084 = vmatpush1.bf16.msra.mxu0 %v1621
    %2085 = vmatprep.subr.bf16.mxu0 %v1626
    %2086 = vmatpush1.bf16.msra.mxu0 %v1625
    %2087 = vmatprep.subr.bf16.mxu0 %v1630
    %2088 = vmatpush1.bf16.msra.mxu0 %v1629
    %2089 = vmatprep.subr.bf16.mxu0 %v1634
    %2090 = vmatpush1.bf16.msra.mxu0 %v1633
    %2091 = vmatprep.subr.bf16.mxu0 %v1638
    %2092 = vmatpush1.bf16.msra.mxu0 %v1637
    %2093 = vmatprep.subr.bf16.mxu0 %v1642
    %2094 = vmatpush1.bf16.msra.mxu0 %v1641
    %2095 = vmatprep.subr.bf16.mxu0 %v1646
    %2096 = vmatpush1.bf16.msra.mxu0 %v1645
    %2097 = vmatprep.subr.bf16.mxu0 %v1650
    %2098 = vmatpush1.bf16.msra.mxu0 %v1649
    %2099 = vmatprep.subr.bf16.mxu0 %v1654
    %2100 = vmatpush1.bf16.msra.mxu0 %v1653
    %2101 = vmatprep.subr.bf16.mxu0 %v1658
    %2102 = vmatpush1.bf16.msra.mxu0 %v1657
    %2103 = vmatprep.subr.bf16.mxu0 %v1662
    %2104 = vmatpush1.bf16.msra.mxu0 %v1661
    %2105 = vmatprep.subr.bf16.mxu0 %v1666
    %2106 = vmatpush1.bf16.msra.mxu0 %v1665
    %2107 = vmatprep.subr.bf16.mxu0 %v1670
    %2108 = vmatpush1.bf16.msra.mxu0 %v1669
    %2109 = vmatprep.subr.bf16.mxu0 %v1674
    %2110 = vmatpush1.bf16.msra.mxu0 %v1673
    %2111 = vmatprep.mubr.bf16.mxu0 %v436
    %2112 = vmatmul.mubr.bf16.gmra.mrb[0].mxu0 %v435
    %v2113 = vpop.f32.mrb[0].mxu0
    %v2114 = vadd.f32 %v2073, %v2113
    %v2115 = vpop.f32.mrb[0].mxu0
    %v2116 = vadd.f32 %v2075, %v2115
    %v2117 = vpop.f32.mrb[0].mxu0
    %v2118 = vpop.f32.mrb[0].mxu0
    %2119 = vdwg.mxu0
    %2120 = vmatprep.subr.bf16.mxu0 %v1678
    %2121 = vmatpush1.bf16.msra.mxu0 %v1677
    %2122 = vmatprep.subr.bf16.mxu0 %v1682
    %2123 = vmatpush1.bf16.msra.mxu0 %v1681
    %2124 = vmatprep.subr.bf16.mxu0 %v1686
    %2125 = vmatpush1.bf16.msra.mxu0 %v1685
    %2126 = vmatprep.subr.bf16.mxu0 %v1690
    %2127 = vmatpush1.bf16.msra.mxu0 %v1689
    %2128 = vmatprep.subr.bf16.mxu0 %v1694
    %2129 = vmatpush1.bf16.msra.mxu0 %v1693
    %2130 = vmatprep.subr.bf16.mxu0 %v1698
    %2131 = vmatpush1.bf16.msra.mxu0 %v1697
    %2132 = vmatprep.subr.bf16.mxu0 %v1702
    %2133 = vmatpush1.bf16.msra.mxu0 %v1701
    %2134 = vmatprep.subr.bf16.mxu0 %v1706
    %2135 = vmatpush1.bf16.msra.mxu0 %v1705
    %2136 = vmatprep.subr.bf16.mxu0 %v1710
    %2137 = vmatpush1.bf16.msra.mxu0 %v1709
    %2138 = vmatprep.subr.bf16.mxu0 %v1714
    %2139 = vmatpush1.bf16.msra.mxu0 %v1713
    %2140 = vmatprep.subr.bf16.mxu0 %v1718
    %2141 = vmatpush1.bf16.msra.mxu0 %v1717
    %2142 = vmatprep.subr.bf16.mxu0 %v1722
    %2143 = vmatpush1.bf16.msra.mxu0 %v1721
    %2144 = vmatprep.subr.bf16.mxu0 %v1726
    %2145 = vmatpush1.bf16.msra.mxu0 %v1725
    %2146 = vmatprep.subr.bf16.mxu0 %v1730
    %2147 = vmatpush1.bf16.msra.mxu0 %v1729
    %2148 = vmatprep.subr.bf16.mxu0 %v1734
    %2149 = vmatpush1.bf16.msra.mxu0 %v1733
    %2150 = vmatprep.subr.bf16.mxu0 %v1738
    %2151 = vmatpush1.bf16.msra.mxu0 %v1737
    %2152 = vmatprep.mubr.bf16.mxu0 %v438
    %2153 = vmatmul.mubr.bf16.gmra.mrb[0].mxu0 %v437
    %v2154 = vpop.f32.mrb[0].mxu0
    %v2155 = vadd.f32 %v2114, %v2154
    %v2156 = vpop.f32.mrb[0].mxu0
    %v2157 = vadd.f32 %v2116, %v2156
    %v2158 = vpop.f32.mrb[0].mxu0
    %v2159 = vpop.f32.mrb[0].mxu0
    %2160 = vdwg.mxu0
    %2161 = vmatprep.subr.bf16.mxu0 %v1488
    %2162 = vmatpush1.bf16.msra.mxu0 %v1487
    %2163 = vmatprep.subr.bf16.mxu0 %v1492
    %2164 = vmatpush1.bf16.msra.mxu0 %v1491
    %2165 = vmatprep.subr.bf16.mxu0 %v1496
    %2166 = vmatpush1.bf16.msra.mxu0 %v1495
    %2167 = vmatprep.subr.bf16.mxu0 %v1500
    %2168 = vmatpush1.bf16.msra.mxu0 %v1499
    %2169 = vmatprep.subr.bf16.mxu0 %v1504
    %2170 = vmatpush1.bf16.msra.mxu0 %v1503
    %2171 = vmatprep.subr.bf16.mxu0 %v1508
    %2172 = vmatpush1.bf16.msra.mxu0 %v1507
    %2173 = vmatprep.subr.bf16.mxu0 %v1512
    %2174 = vmatpush1.bf16.msra.mxu0 %v1511
    %2175 = vmatprep.subr.bf16.mxu0 %v1516
    %2176 = vmatpush1.bf16.msra.mxu0 %v1515
    %2177 = vmatprep.subr.bf16.mxu0 %v1520
    %2178 = vmatpush1.bf16.msra.mxu0 %v1519
    %2179 = vmatprep.subr.bf16.mxu0 %v1524
    %2180 = vmatpush1.bf16.msra.mxu0 %v1523
    %2181 = vmatprep.subr.bf16.mxu0 %v1528
    %2182 = vmatpush1.bf16.msra.mxu0 %v1527
    %2183 = vmatprep.subr.bf16.mxu0 %v1532
    %2184 = vmatpush1.bf16.msra.mxu0 %v1531
    %2185 = vmatprep.subr.bf16.mxu0 %v1536
    %2186 = vmatpush1.bf16.msra.mxu0 %v1535
    %2187 = vmatprep.subr.bf16.mxu0 %v1540
    %2188 = vmatpush1.bf16.msra.mxu0 %v1539
    %2189 = vmatprep.subr.bf16.mxu0 %v1544
    %2190 = vmatpush1.bf16.msra.mxu0 %v1543
    %2191 = vmatprep.subr.bf16.mxu0 %v1548
    %2192 = vmatpush1.bf16.msra.mxu0 %v1547
    %2193 = vmatprep.mubr.bf16.mxu0 %v432
    %2194 = vmatmul.mubr.bf16.gmra.mrb[0].mxu0 %v431
    %v2195 = vpop.f32.mrb[0].mxu0
    %v2196 = vadd.f32 %v708, %v2195
    %v2197 = vpop.f32.mrb[0].mxu0
    %v2198 = vadd.f32 %v712, %v2197
    %v2199 = vpop.f32.mrb[0].mxu0
    %v2200 = vpop.f32.mrb[0].mxu0
    %2201 = vdwg.mxu0
    %2202 = vmatprep.subr.bf16.mxu0 %v1552
    %2203 = vmatpush1.bf16.msra.mxu0 %v1551
    %2204 = vmatprep.subr.bf16.mxu0 %v1556
    %2205 = vmatpush1.bf16.msra.mxu0 %v1555
    %2206 = vmatprep.subr.bf16.mxu0 %v1560
    %2207 = vmatpush1.bf16.msra.mxu0 %v1559
    %2208 = vmatprep.subr.bf16.mxu0 %v1564
    %2209 = vmatpush1.bf16.msra.mxu0 %v1563
    %2210 = vmatprep.subr.bf16.mxu0 %v1568
    %2211 = vmatpush1.bf16.msra.mxu0 %v1567
    %2212 = vmatprep.subr.bf16.mxu0 %v1572
    %2213 = vmatpush1.bf16.msra.mxu0 %v1571
    %2214 = vmatprep.subr.bf16.mxu0 %v1576
    %2215 = vmatpush1.bf16.msra.mxu0 %v1575
    %2216 = vmatprep.subr.bf16.mxu0 %v1580
    %2217 = vmatpush1.bf16.msra.mxu0 %v1579
    %2218 = vmatprep.subr.bf16.mxu0 %v1584
    %2219 = vmatpush1.bf16.msra.mxu0 %v1583
    %2220 = vmatprep.subr.bf16.mxu0 %v1588
    %2221 = vmatpush1.bf16.msra.mxu0 %v1587
    %2222 = vmatprep.subr.bf16.mxu0 %v1592
    %2223 = vmatpush1.bf16.msra.mxu0 %v1591
    %2224 = vmatprep.subr.bf16.mxu0 %v1596
    %2225 = vmatpush1.bf16.msra.mxu0 %v1595
    %2226 = vmatprep.subr.bf16.mxu0 %v1600
    %2227 = vmatpush1.bf16.msra.mxu0 %v1599
    %2228 = vmatprep.subr.bf16.mxu0 %v1604
    %2229 = vmatpush1.bf16.msra.mxu0 %v1603
    %2230 = vmatprep.subr.bf16.mxu0 %v1608
    %2231 = vmatpush1.bf16.msra.mxu0 %v1607
    %2232 = vmatprep.subr.bf16.mxu0 %v1612
    %2233 = vmatpush1.bf16.msra.mxu0 %v1611
    %2234 = vmatprep.mubr.bf16.mxu0 %v434
    %2235 = vmatmul.mubr.bf16.gmra.mrb[0].mxu0 %v433
    %v2236 = vpop.f32.mrb[0].mxu0
    %v2237 = vadd.f32 %v2196, %v2236
    %v2238 = vpop.f32.mrb[0].mxu0
    %v2239 = vadd.f32 %v2198, %v2238
    %v2240 = vpop.f32.mrb[0].mxu0
    %v2241 = vpop.f32.mrb[0].mxu0
    %2242 = vdwg.mxu0
    %2243 = vmatprep.subr.bf16.mxu0 %v1616
    %2244 = vmatpush1.bf16.msra.mxu0 %v1615
    %2245 = vmatprep.subr.bf16.mxu0 %v1620
    %2246 = vmatpush1.bf16.msra.mxu0 %v1619
    %2247 = vmatprep.subr.bf16.mxu0 %v1624
    %2248 = vmatpush1.bf16.msra.mxu0 %v1623
    %2249 = vmatprep.subr.bf16.mxu0 %v1628
    %2250 = vmatpush1.bf16.msra.mxu0 %v1627
    %2251 = vmatprep.subr.bf16.mxu0 %v1632
    %2252 = vmatpush1.bf16.msra.mxu0 %v1631
    %2253 = vmatprep.subr.bf16.mxu0 %v1636
    %2254 = vmatpush1.bf16.msra.mxu0 %v1635
    %2255 = vmatprep.subr.bf16.mxu0 %v1640
    %2256 = vmatpush1.bf16.msra.mxu0 %v1639
    %2257 = vmatprep.subr.bf16.mxu0 %v1644
    %2258 = vmatpush1.bf16.msra.mxu0 %v1643
    %2259 = vmatprep.subr.bf16.mxu0 %v1648
    %2260 = vmatpush1.bf16.msra.mxu0 %v1647
    %2261 = vmatprep.subr.bf16.mxu0 %v1652
    %2262 = vmatpush1.bf16.msra.mxu0 %v1651
    %2263 = vmatprep.subr.bf16.mxu0 %v1656
    %2264 = vmatpush1.bf16.msra.mxu0 %v1655
    %2265 = vmatprep.subr.bf16.mxu0 %v1660
    %2266 = vmatpush1.bf16.msra.mxu0 %v1659
    %2267 = vmatprep.subr.bf16.mxu0 %v1664
    %2268 = vmatpush1.bf16.msra.mxu0 %v1663
    %2269 = vmatprep.subr.bf16.mxu0 %v1668
    %2270 = vmatpush1.bf16.msra.mxu0 %v1667
    %2271 = vmatprep.subr.bf16.mxu0 %v1672
    %2272 = vmatpush1.bf16.msra.mxu0 %v1671
    %2273 = vmatprep.subr.bf16.mxu0 %v1676
    %2274 = vmatpush1.bf16.msra.mxu0 %v1675
    %2275 = vmatprep.mubr.bf16.mxu0 %v436
    %2276 = vmatmul.mubr.bf16.gmra.mrb[0].mxu0 %v435
    %v2277 = vpop.f32.mrb[0].mxu0
    %v2278 = vadd.f32 %v2237, %v2277
    %v2279 = vpop.f32.mrb[0].mxu0
    %v2280 = vadd.f32 %v2239, %v2279
    %v2281 = vpop.f32.mrb[0].mxu0
    %v2282 = vpop.f32.mrb[0].mxu0
    %2283 = vdwg.mxu0
    %2284 = vmatprep.subr.bf16.mxu0 %v1680
    %2285 = vmatpush1.bf16.msra.mxu0 %v1679
    %2286 = vmatprep.subr.bf16.mxu0 %v1684
    %2287 = vmatpush1.bf16.msra.mxu0 %v1683
    %2288 = vmatprep.subr.bf16.mxu0 %v1688
    %2289 = vmatpush1.bf16.msra.mxu0 %v1687
    %2290 = vmatprep.subr.bf16.mxu0 %v1692
    %2291 = vmatpush1.bf16.msra.mxu0 %v1691
    %2292 = vmatprep.subr.bf16.mxu0 %v1696
    %2293 = vmatpush1.bf16.msra.mxu0 %v1695
    %2294 = vmatprep.subr.bf16.mxu0 %v1700
    %2295 = vmatpush1.bf16.msra.mxu0 %v1699
    %2296 = vmatprep.subr.bf16.mxu0 %v1704
    %2297 = vmatpush1.bf16.msra.mxu0 %v1703
    %2298 = vmatprep.subr.bf16.mxu0 %v1708
    %2299 = vmatpush1.bf16.msra.mxu0 %v1707
    %2300 = vmatprep.subr.bf16.mxu0 %v1712
    %2301 = vmatpush1.bf16.msra.mxu0 %v1711
    %2302 = vmatprep.subr.bf16.mxu0 %v1716
    %2303 = vmatpush1.bf16.msra.mxu0 %v1715
    %2304 = vmatprep.subr.bf16.mxu0 %v1720
    %2305 = vmatpush1.bf16.msra.mxu0 %v1719
    %2306 = vmatprep.subr.bf16.mxu0 %v1724
    %2307 = vmatpush1.bf16.msra.mxu0 %v1723
    %2308 = vmatprep.subr.bf16.mxu0 %v1728
    %2309 = vmatpush1.bf16.msra.mxu0 %v1727
    %2310 = vmatprep.subr.bf16.mxu0 %v1732
    %2311 = vmatpush1.bf16.msra.mxu0 %v1731
    %2312 = vmatprep.subr.bf16.mxu0 %v1736
    %2313 = vmatpush1.bf16.msra.mxu0 %v1735
    %2314 = vmatprep.subr.bf16.mxu0 %v1740
    %2315 = vmatpush1.bf16.msra.mxu0 %v1739
    %2316 = vmatprep.mubr.bf16.mxu0 %v438
    %2317 = vmatmul.mubr.bf16.gmra.mrb[0].mxu0 %v437
    %v2318 = vpop.f32.mrb[0].mxu0
    %v2319 = vadd.f32 %v2278, %v2318
    %v2320 = vpop.f32.mrb[0].mxu0
    %v2321 = vadd.f32 %v2280, %v2320
    %v2322 = vpop.f32.mrb[0].mxu0
    %v2323 = vpop.f32.mrb[0].mxu0
    %2324 = vdwg.mxu0
    %v2325 = vpack.c.bf16 %v2155, %v2155
    %v2326 = vpack.c.bf16 %v2157, %v2157
    %v2327 = vpack.c.bf16 %v2319, %v2319
    %v2328 = vpack.c.bf16 %v2321, %v2321
    %v2329 = vmul.bf16 %v2325, 1009007652
    %v2330 = vmul.bf16 %v2326, 1009007652
    %v2331 = vmul.bf16 %v2327, 1009007652
    %v2332 = vmul.bf16 %v2328, 1009007652
    %v2333 = vmax.bf16 %v2325, %v2329
    %v2334 = vmax.bf16 %v2326, %v2330
    %v2335 = vmax.bf16 %v2327, %v2331
    %v2336 = vmax.bf16 %v2328, %v2332
    %v2337 = vld [vmem:[#allocation8] sm:$0xff]
    %v2338 = vld [vmem:[#allocation8 + $0x8] sm:$0xff]
    %v2339 = vld [vmem:[#allocation8 + $0x10] sm:$0xff]
    %v2340 = vld [vmem:[#allocation8 + $0x18] sm:$0xff]
    %v2341 = vld [vmem:[#allocation8 + $0x20] sm:$0xff]
    %v2342 = vld [vmem:[#allocation8 + $0x28] sm:$0xff]
    %v2343 = vld [vmem:[#allocation8 + $0x30] sm:$0xff]
    %v2344 = vld [vmem:[#allocation8 + $0x38] sm:$0xff]
    %v2345 = vld [vmem:[#allocation8 + $0x40] sm:$0xff]
    %v2346 = vld [vmem:[#allocation8 + $0x48] sm:$0xff]
    %v2347 = vld [vmem:[#allocation8 + $0x50] sm:$0xff]
    %v2348 = vld [vmem:[#allocation8 + $0x58] sm:$0xff]
    %v2349 = vld [vmem:[#allocation8 + $0x60] sm:$0xff]
    %v2350 = vld [vmem:[#allocation8 + $0x68] sm:$0xff]
    %v2351 = vld [vmem:[#allocation8 + $0x70] sm:$0xff]
    %v2352 = vld [vmem:[#allocation8 + $0x78] sm:$0xff]
    %v2353 = vld [vmem:[#allocation8 + $0x80] sm:$0xff]
    %v2354 = vld [vmem:[#allocation8 + $0x88] sm:$0xff]
    %v2355 = vld [vmem:[#allocation8 + $0x90] sm:$0xff]
    %v2356 = vld [vmem:[#allocation8 + $0x98] sm:$0xff]
    %v2357 = vld [vmem:[#allocation8 + $0xa0] sm:$0xff]
    %v2358 = vld [vmem:[#allocation8 + $0xa8] sm:$0xff]
    %v2359 = vld [vmem:[#allocation8 + $0xb0] sm:$0xff]
    %v2360 = vld [vmem:[#allocation8 + $0xb8] sm:$0xff]
    %v2361 = vld [vmem:[#allocation8 + $0xc0] sm:$0xff]
    %v2362 = vld [vmem:[#allocation8 + $0xc8] sm:$0xff]
    %v2363 = vld [vmem:[#allocation8 + $0xd0] sm:$0xff]
    %v2364 = vld [vmem:[#allocation8 + $0xd8] sm:$0xff]
    %v2365 = vld [vmem:[#allocation8 + $0xe0] sm:$0xff]
    %v2366 = vld [vmem:[#allocation8 + $0xe8] sm:$0xff]
    %v2367 = vld [vmem:[#allocation8 + $0xf0] sm:$0xff]
    %v2368 = vld [vmem:[#allocation8 + $0xf8] sm:$0xff]
    %v2369 = vld [vmem:[#allocation8 + $0x100] sm:$0xff]
    %v2370 = vld [vmem:[#allocation8 + $0x108] sm:$0xff]
    %v2371 = vld [vmem:[#allocation8 + $0x110] sm:$0xff]
    %v2372 = vld [vmem:[#allocation8 + $0x118] sm:$0xff]
    %v2373 = vld [vmem:[#allocation8 + $0x120] sm:$0xff]
    %v2374 = vld [vmem:[#allocation8 + $0x128] sm:$0xff]
    %v2375 = vld [vmem:[#allocation8 + $0x130] sm:$0xff]
    %v2376 = vld [vmem:[#allocation8 + $0x138] sm:$0xff]
    %v2377 = vld [vmem:[#allocation8 + $0x140] sm:$0xff]
    %v2378 = vld [vmem:[#allocation8 + $0x148] sm:$0xff]
    %v2379 = vld [vmem:[#allocation8 + $0x150] sm:$0xff]
    %v2380 = vld [vmem:[#allocation8 + $0x158] sm:$0xff]
    %v2381 = vld [vmem:[#allocation8 + $0x160] sm:$0xff]
    %v2382 = vld [vmem:[#allocation8 + $0x168] sm:$0xff]
    %v2383 = vld [vmem:[#allocation8 + $0x170] sm:$0xff]
    %v2384 = vld [vmem:[#allocation8 + $0x178] sm:$0xff]
    %v2385 = vld [vmem:[#allocation8 + $0x180] sm:$0xff]
    %v2386 = vld [vmem:[#allocation8 + $0x188] sm:$0xff]
    %v2387 = vld [vmem:[#allocation8 + $0x190] sm:$0xff]
    %v2388 = vld [vmem:[#allocation8 + $0x198] sm:$0xff]
    %v2389 = vld [vmem:[#allocation8 + $0x1a0] sm:$0xff]
    %v2390 = vld [vmem:[#allocation8 + $0x1a8] sm:$0xff]
    %v2391 = vld [vmem:[#allocation8 + $0x1b0] sm:$0xff]
    %v2392 = vld [vmem:[#allocation8 + $0x1b8] sm:$0xff]
    %v2393 = vld [vmem:[#allocation8 + $0x1c0] sm:$0xff]
    %v2394 = vld [vmem:[#allocation8 + $0x1c8] sm:$0xff]
    %v2395 = vld [vmem:[#allocation8 + $0x1d0] sm:$0xff]
    %v2396 = vld [vmem:[#allocation8 + $0x1d8] sm:$0xff]
    %v2397 = vld [vmem:[#allocation8 + $0x1e0] sm:$0xff]
    %v2398 = vld [vmem:[#allocation8 + $0x1e8] sm:$0xff]
    %v2399 = vld [vmem:[#allocation8 + $0x1f0] sm:$0xff]
    %v2400 = vld [vmem:[#allocation8 + $0x1f8] sm:$0xff]
    %v2401 = vld [vmem:[%s6] sm:$0x3]
    %v2403 = vlaneseq
    %v2404 = vshrl.u32 %v2403, 7
    %v2405 = vsub.s32 0, %v2404
    %v2406 = vrot.slane %v2401, %v2405
    %v2407 = vlaneseq
    %v2408 = vshrl.u32 %v2407, 7
    %v2409 = vsub.s32 1, %v2408
    %v2410 = vrot.slane %v2401, %v2409
    %v2477 = vunpack.c.l.b16 %v2337
    %v2478 = vunpack.c.h.b16 %v2337
    %v2479 = vunpack.c.l.b16 %v2338
    %v2480 = vunpack.c.h.b16 %v2338
    %v2481 = vunpack.c.l.b16 %v2339
    %v2482 = vunpack.c.h.b16 %v2339
    %v2483 = vunpack.c.l.b16 %v2340
    %v2484 = vunpack.c.h.b16 %v2340
    %v2485 = vunpack.c.l.b16 %v2341
    %v2486 = vunpack.c.h.b16 %v2341
    %v2487 = vunpack.c.l.b16 %v2342
    %v2488 = vunpack.c.h.b16 %v2342
    %v2489 = vunpack.c.l.b16 %v2343
    %v2490 = vunpack.c.h.b16 %v2343
    %v2491 = vunpack.c.l.b16 %v2344
    %v2492 = vunpack.c.h.b16 %v2344
    %v2493 = vunpack.c.l.b16 %v2345
    %v2494 = vunpack.c.h.b16 %v2345
    %v2495 = vunpack.c.l.b16 %v2346
    %v2496 = vunpack.c.h.b16 %v2346
    %v2497 = vunpack.c.l.b16 %v2347
    %v2498 = vunpack.c.h.b16 %v2347
    %v2499 = vunpack.c.l.b16 %v2348
    %v2500 = vunpack.c.h.b16 %v2348
    %v2501 = vunpack.c.l.b16 %v2349
    %v2502 = vunpack.c.h.b16 %v2349
    %v2503 = vunpack.c.l.b16 %v2350
    %v2504 = vunpack.c.h.b16 %v2350
    %v2505 = vunpack.c.l.b16 %v2351
    %v2506 = vunpack.c.h.b16 %v2351
    %v2507 = vunpack.c.l.b16 %v2352
    %v2508 = vunpack.c.h.b16 %v2352
    %v2509 = vunpack.c.l.b16 %v2353
    %v2510 = vunpack.c.h.b16 %v2353
    %v2511 = vunpack.c.l.b16 %v2354
    %v2512 = vunpack.c.h.b16 %v2354
    %v2513 = vunpack.c.l.b16 %v2355
    %v2514 = vunpack.c.h.b16 %v2355
    %v2515 = vunpack.c.l.b16 %v2356
    %v2516 = vunpack.c.h.b16 %v2356
    %v2517 = vunpack.c.l.b16 %v2357
    %v2518 = vunpack.c.h.b16 %v2357
    %v2519 = vunpack.c.l.b16 %v2358
    %v2520 = vunpack.c.h.b16 %v2358
    %v2521 = vunpack.c.l.b16 %v2359
    %v2522 = vunpack.c.h.b16 %v2359
    %v2523 = vunpack.c.l.b16 %v2360
    %v2524 = vunpack.c.h.b16 %v2360
    %v2525 = vunpack.c.l.b16 %v2361
    %v2526 = vunpack.c.h.b16 %v2361
    %v2527 = vunpack.c.l.b16 %v2362
    %v2528 = vunpack.c.h.b16 %v2362
    %v2529 = vunpack.c.l.b16 %v2363
    %v2530 = vunpack.c.h.b16 %v2363
    %v2531 = vunpack.c.l.b16 %v2364
    %v2532 = vunpack.c.h.b16 %v2364
    %v2533 = vunpack.c.l.b16 %v2365
    %v2534 = vunpack.c.h.b16 %v2365
    %v2535 = vunpack.c.l.b16 %v2366
    %v2536 = vunpack.c.h.b16 %v2366
    %v2537 = vunpack.c.l.b16 %v2367
    %v2538 = vunpack.c.h.b16 %v2367
    %v2539 = vunpack.c.l.b16 %v2368
    %v2540 = vunpack.c.h.b16 %v2368
    %v2541 = vunpack.c.l.b16 %v2369
    %v2542 = vunpack.c.h.b16 %v2369
    %v2543 = vunpack.c.l.b16 %v2370
    %v2544 = vunpack.c.h.b16 %v2370
    %v2545 = vunpack.c.l.b16 %v2371
    %v2546 = vunpack.c.h.b16 %v2371
    %v2547 = vunpack.c.l.b16 %v2372
    %v2548 = vunpack.c.h.b16 %v2372
    %v2549 = vunpack.c.l.b16 %v2373
    %v2550 = vunpack.c.h.b16 %v2373
    %v2551 = vunpack.c.l.b16 %v2374
    %v2552 = vunpack.c.h.b16 %v2374
    %v2553 = vunpack.c.l.b16 %v2375
    %v2554 = vunpack.c.h.b16 %v2375
    %v2555 = vunpack.c.l.b16 %v2376
    %v2556 = vunpack.c.h.b16 %v2376
    %v2557 = vunpack.c.l.b16 %v2377
    %v2558 = vunpack.c.h.b16 %v2377
    %v2559 = vunpack.c.l.b16 %v2378
    %v2560 = vunpack.c.h.b16 %v2378
    %v2561 = vunpack.c.l.b16 %v2379
    %v2562 = vunpack.c.h.b16 %v2379
    %v2563 = vunpack.c.l.b16 %v2380
    %v2564 = vunpack.c.h.b16 %v2380
    %v2565 = vunpack.c.l.b16 %v2381
    %v2566 = vunpack.c.h.b16 %v2381
    %v2567 = vunpack.c.l.b16 %v2382
    %v2568 = vunpack.c.h.b16 %v2382
    %v2569 = vunpack.c.l.b16 %v2383
    %v2570 = vunpack.c.h.b16 %v2383
    %v2571 = vunpack.c.l.b16 %v2384
    %v2572 = vunpack.c.h.b16 %v2384
    %v2573 = vunpack.c.l.b16 %v2385
    %v2574 = vunpack.c.h.b16 %v2385
    %v2575 = vunpack.c.l.b16 %v2386
    %v2576 = vunpack.c.h.b16 %v2386
    %v2577 = vunpack.c.l.b16 %v2387
    %v2578 = vunpack.c.h.b16 %v2387
    %v2579 = vunpack.c.l.b16 %v2388
    %v2580 = vunpack.c.h.b16 %v2388
    %v2581 = vunpack.c.l.b16 %v2389
    %v2582 = vunpack.c.h.b16 %v2389
    %v2583 = vunpack.c.l.b16 %v2390
    %v2584 = vunpack.c.h.b16 %v2390
    %v2585 = vunpack.c.l.b16 %v2391
    %v2586 = vunpack.c.h.b16 %v2391
    %v2587 = vunpack.c.l.b16 %v2392
    %v2588 = vunpack.c.h.b16 %v2392
    %v2589 = vunpack.c.l.b16 %v2393
    %v2590 = vunpack.c.h.b16 %v2393
    %v2591 = vunpack.c.l.b16 %v2394
    %v2592 = vunpack.c.h.b16 %v2394
    %v2593 = vunpack.c.l.b16 %v2395
    %v2594 = vunpack.c.h.b16 %v2395
    %v2595 = vunpack.c.l.b16 %v2396
    %v2596 = vunpack.c.h.b16 %v2396
    %v2597 = vunpack.c.l.b16 %v2397
    %v2598 = vunpack.c.h.b16 %v2397
    %v2599 = vunpack.c.l.b16 %v2398
    %v2600 = vunpack.c.h.b16 %v2398
    %v2601 = vunpack.c.l.b16 %v2399
    %v2602 = vunpack.c.h.b16 %v2399
    %v2603 = vunpack.c.l.b16 %v2400
    %v2604 = vunpack.c.h.b16 %v2400
    %v2605 = vpack.c.b16 %v2479, %v2477
    %v2606 = vpack.c.b16 %v2480, %v2478
    %v2607 = vpack.c.b16 %v2483, %v2481
    %v2608 = vpack.c.b16 %v2484, %v2482
    %v2609 = vpack.c.b16 %v2487, %v2485
    %v2610 = vpack.c.b16 %v2488, %v2486
    %v2611 = vpack.c.b16 %v2491, %v2489
    %v2612 = vpack.c.b16 %v2492, %v2490
    %v2613 = vpack.c.b16 %v2495, %v2493
    %v2614 = vpack.c.b16 %v2496, %v2494
    %v2615 = vpack.c.b16 %v2499, %v2497
    %v2616 = vpack.c.b16 %v2500, %v2498
    %v2617 = vpack.c.b16 %v2503, %v2501
    %v2618 = vpack.c.b16 %v2504, %v2502
    %v2619 = vpack.c.b16 %v2507, %v2505
    %v2620 = vpack.c.b16 %v2508, %v2506
    %v2621 = vpack.c.b16 %v2511, %v2509
    %v2622 = vpack.c.b16 %v2512, %v2510
    %v2623 = vpack.c.b16 %v2515, %v2513
    %v2624 = vpack.c.b16 %v2516, %v2514
    %v2625 = vpack.c.b16 %v2519, %v2517
    %v2626 = vpack.c.b16 %v2520, %v2518
    %v2627 = vpack.c.b16 %v2523, %v2521
    %v2628 = vpack.c.b16 %v2524, %v2522
    %v2629 = vpack.c.b16 %v2527, %v2525
    %v2630 = vpack.c.b16 %v2528, %v2526
    %v2631 = vpack.c.b16 %v2531, %v2529
    %v2632 = vpack.c.b16 %v2532, %v2530
    %v2633 = vpack.c.b16 %v2535, %v2533
    %v2634 = vpack.c.b16 %v2536, %v2534
    %v2635 = vpack.c.b16 %v2539, %v2537
    %v2636 = vpack.c.b16 %v2540, %v2538
    %v2637 = vpack.c.b16 %v2543, %v2541
    %v2638 = vpack.c.b16 %v2544, %v2542
    %v2639 = vpack.c.b16 %v2547, %v2545
    %v2640 = vpack.c.b16 %v2548, %v2546
    %v2641 = vpack.c.b16 %v2551, %v2549
    %v2642 = vpack.c.b16 %v2552, %v2550
    %v2643 = vpack.c.b16 %v2555, %v2553
    %v2644 = vpack.c.b16 %v2556, %v2554
    %v2645 = vpack.c.b16 %v2559, %v2557
    %v2646 = vpack.c.b16 %v2560, %v2558
    %v2647 = vpack.c.b16 %v2563, %v2561
    %v2648 = vpack.c.b16 %v2564, %v2562
    %v2649 = vpack.c.b16 %v2567, %v2565
    %v2650 = vpack.c.b16 %v2568, %v2566
    %v2651 = vpack.c.b16 %v2571, %v2569
    %v2652 = vpack.c.b16 %v2572, %v2570
    %v2653 = vpack.c.b16 %v2575, %v2573
    %v2654 = vpack.c.b16 %v2576, %v2574
    %v2655 = vpack.c.b16 %v2579, %v2577
    %v2656 = vpack.c.b16 %v2580, %v2578
    %v2657 = vpack.c.b16 %v2583, %v2581
    %v2658 = vpack.c.b16 %v2584, %v2582
    %v2659 = vpack.c.b16 %v2587, %v2585
    %v2660 = vpack.c.b16 %v2588, %v2586
    %v2661 = vpack.c.b16 %v2591, %v2589
    %v2662 = vpack.c.b16 %v2592, %v2590
    %v2663 = vpack.c.b16 %v2595, %v2593
    %v2664 = vpack.c.b16 %v2596, %v2594
    %v2665 = vpack.c.b16 %v2599, %v2597
    %v2666 = vpack.c.b16 %v2600, %v2598
    %v2667 = vpack.c.b16 %v2603, %v2601
    %v2668 = vpack.c.b16 %v2604, %v2602
    %2733 = vmatprep.subr.bf16.mxu0 %v2606
    %2734 = vmatpush1.bf16.msra.mxu0 %v2605
    %2735 = vmatprep.subr.bf16.mxu0 %v2608
    %2736 = vmatpush1.bf16.msra.mxu0 %v2607
    %2737 = vmatprep.subr.bf16.mxu0 %v2610
    %2738 = vmatpush1.bf16.msra.mxu0 %v2609
    %2739 = vmatprep.subr.bf16.mxu0 %v2612
    %2740 = vmatpush1.bf16.msra.mxu0 %v2611
    %2741 = vmatprep.subr.bf16.mxu0 %v2614
    %2742 = vmatpush1.bf16.msra.mxu0 %v2613
    %2743 = vmatprep.subr.bf16.mxu0 %v2616
    %2744 = vmatpush1.bf16.msra.mxu0 %v2615
    %2745 = vmatprep.subr.bf16.mxu0 %v2618
    %2746 = vmatpush1.bf16.msra.mxu0 %v2617
    %2747 = vmatprep.subr.bf16.mxu0 %v2620
    %2748 = vmatpush1.bf16.msra.mxu0 %v2619
    %2749 = vmatprep.subr.bf16.mxu0 %v2622
    %2750 = vmatpush1.bf16.msra.mxu0 %v2621
    %2751 = vmatprep.subr.bf16.mxu0 %v2624
    %2752 = vmatpush1.bf16.msra.mxu0 %v2623
    %2753 = vmatprep.subr.bf16.mxu0 %v2626
    %2754 = vmatpush1.bf16.msra.mxu0 %v2625
    %2755 = vmatprep.subr.bf16.mxu0 %v2628
    %2756 = vmatpush1.bf16.msra.mxu0 %v2627
    %2757 = vmatprep.subr.bf16.mxu0 %v2630
    %2758 = vmatpush1.bf16.msra.mxu0 %v2629
    %2759 = vmatprep.subr.bf16.mxu0 %v2632
    %2760 = vmatpush1.bf16.msra.mxu0 %v2631
    %2761 = vmatprep.subr.bf16.mxu0 %v2634
    %2762 = vmatpush1.bf16.msra.mxu0 %v2633
    %2763 = vmatprep.subr.bf16.mxu0 %v2636
    %2764 = vmatpush1.bf16.msra.mxu0 %v2635
    %2765 = vmatprep.mubr.bf16.mxu0 %v2334
    %2766 = vmatmul.mubr.bf16.gmra.mrb[0].mxu0 %v2333
    %v2767 = vpop.f32.mrb[0].mxu0
    %v2768 = vadd.f32 %v2406, %v2767
    %v2769 = vpop.f32.mrb[0].mxu0
    %v2770 = vadd.f32 %v2410, %v2769
    %v2771 = vpop.f32.mrb[0].mxu0
    %v2772 = vpop.f32.mrb[0].mxu0
    %2773 = vdwg.mxu0
    %2774 = vmatprep.subr.bf16.mxu0 %v2638
    %2775 = vmatpush1.bf16.msra.mxu0 %v2637
    %2776 = vmatprep.subr.bf16.mxu0 %v2640
    %2777 = vmatpush1.bf16.msra.mxu0 %v2639
    %2778 = vmatprep.subr.bf16.mxu0 %v2642
    %2779 = vmatpush1.bf16.msra.mxu0 %v2641
    %2780 = vmatprep.subr.bf16.mxu0 %v2644
    %2781 = vmatpush1.bf16.msra.mxu0 %v2643
    %2782 = vmatprep.subr.bf16.mxu0 %v2646
    %2783 = vmatpush1.bf16.msra.mxu0 %v2645
    %2784 = vmatprep.subr.bf16.mxu0 %v2648
    %2785 = vmatpush1.bf16.msra.mxu0 %v2647
    %2786 = vmatprep.subr.bf16.mxu0 %v2650
    %2787 = vmatpush1.bf16.msra.mxu0 %v2649
    %2788 = vmatprep.subr.bf16.mxu0 %v2652
    %2789 = vmatpush1.bf16.msra.mxu0 %v2651
    %2790 = vmatprep.subr.bf16.mxu0 %v2654
    %2791 = vmatpush1.bf16.msra.mxu0 %v2653
    %2792 = vmatprep.subr.bf16.mxu0 %v2656
    %2793 = vmatpush1.bf16.msra.mxu0 %v2655
    %2794 = vmatprep.subr.bf16.mxu0 %v2658
    %2795 = vmatpush1.bf16.msra.mxu0 %v2657
    %2796 = vmatprep.subr.bf16.mxu0 %v2660
    %2797 = vmatpush1.bf16.msra.mxu0 %v2659
    %2798 = vmatprep.subr.bf16.mxu0 %v2662
    %2799 = vmatpush1.bf16.msra.mxu0 %v2661
    %2800 = vmatprep.subr.bf16.mxu0 %v2664
    %2801 = vmatpush1.bf16.msra.mxu0 %v2663
    %2802 = vmatprep.subr.bf16.mxu0 %v2666
    %2803 = vmatpush1.bf16.msra.mxu0 %v2665
    %2804 = vmatprep.subr.bf16.mxu0 %v2668
    %2805 = vmatpush1.bf16.msra.mxu0 %v2667
    %2806 = vmatprep.mubr.bf16.mxu0 %v2336
    %2807 = vmatmul.mubr.bf16.gmra.mrb[0].mxu0 %v2335
    %v2808 = vpop.f32.mrb[0].mxu0
    %v2809 = vadd.f32 %v2768, %v2808
    %v2810 = vpop.f32.mrb[0].mxu0
    %v2811 = vadd.f32 %v2770, %v2810
    %v2812 = vpop.f32.mrb[0].mxu0
    %v2813 = vpop.f32.mrb[0].mxu0
    %2814 = vdwg.mxu0
    %v2815 = vpack.c.bf16 %v2809, %v2809
    %v2816 = vpack.c.bf16 %v2811, %v2811
    %v2817 = vmul.bf16 %v2815, 1009007652
    %v2818 = vmul.bf16 %v2816, 1009007652
    %v2819 = vmax.bf16 %v2815, %v2817
    %v2820 = vmax.bf16 %v2816, %v2818
    %v2821 = vld [vmem:[#allocation10] sm:$0xf]
    %v2822 = vld [vmem:[#allocation10 + $0x4] sm:$0xf]
    %v2823 = vld [vmem:[#allocation10 + $0x8] sm:$0xf]
    %v2824 = vld [vmem:[#allocation10 + $0xc] sm:$0xf]
    %v2825 = vld [vmem:[#allocation10 + $0x10] sm:$0xf]
    %v2826 = vld [vmem:[#allocation10 + $0x14] sm:$0xf]
    %v2827 = vld [vmem:[#allocation10 + $0x18] sm:$0xf]
    %v2828 = vld [vmem:[#allocation10 + $0x1c] sm:$0xf]
    %v2829 = vld [vmem:[#allocation10 + $0x20] sm:$0xf]
    %v2830 = vld [vmem:[#allocation10 + $0x24] sm:$0xf]
    %v2831 = vld [vmem:[#allocation10 + $0x28] sm:$0xf]
    %v2832 = vld [vmem:[#allocation10 + $0x2c] sm:$0xf]
    %v2833 = vld [vmem:[#allocation10 + $0x30] sm:$0xf]
    %v2834 = vld [vmem:[#allocation10 + $0x34] sm:$0xf]
    %v2835 = vld [vmem:[#allocation10 + $0x38] sm:$0xf]
    %v2836 = vld [vmem:[#allocation10 + $0x3c] sm:$0xf]
    %v2837 = vld [vmem:[#allocation10 + $0x40] sm:$0xf]
    %v2838 = vld [vmem:[#allocation10 + $0x44] sm:$0xf]
    %v2839 = vld [vmem:[#allocation10 + $0x48] sm:$0xf]
    %v2840 = vld [vmem:[#allocation10 + $0x4c] sm:$0xf]
    %v2841 = vld [vmem:[#allocation10 + $0x50] sm:$0xf]
    %v2842 = vld [vmem:[#allocation10 + $0x54] sm:$0xf]
    %v2843 = vld [vmem:[#allocation10 + $0x58] sm:$0xf]
    %v2844 = vld [vmem:[#allocation10 + $0x5c] sm:$0xf]
    %v2845 = vld [vmem:[#allocation10 + $0x60] sm:$0xf]
    %v2846 = vld [vmem:[#allocation10 + $0x64] sm:$0xf]
    %v2847 = vld [vmem:[#allocation10 + $0x68] sm:$0xf]
    %v2848 = vld [vmem:[#allocation10 + $0x6c] sm:$0xf]
    %v2849 = vld [vmem:[#allocation10 + $0x70] sm:$0xf]
    %v2850 = vld [vmem:[#allocation10 + $0x74] sm:$0xf]
    %v2851 = vld [vmem:[#allocation10 + $0x78] sm:$0xf]
    %v2852 = vld [vmem:[#allocation10 + $0x7c] sm:$0xf]
    %v2853 = vld [vmem:[%s8] sm:$0x1]
    %v2855 = vlaneseq
    %v2856 = vshrl.u32 %v2855, 7
    %v2857 = vsub.s32 0, %v2856
    %v2858 = vrot.slane %v2853, %v2857
    %v2892 = vunpack.c.l.b16 %v2821
    %v2893 = vunpack.c.l.b16 %v2822
    %v2894 = vunpack.c.l.b16 %v2823
    %v2895 = vunpack.c.l.b16 %v2824
    %v2896 = vunpack.c.l.b16 %v2825
    %v2897 = vunpack.c.l.b16 %v2826
    %v2898 = vunpack.c.l.b16 %v2827
    %v2899 = vunpack.c.l.b16 %v2828
    %v2900 = vunpack.c.l.b16 %v2829
    %v2901 = vunpack.c.l.b16 %v2830
    %v2902 = vunpack.c.l.b16 %v2831
    %v2903 = vunpack.c.l.b16 %v2832
    %v2904 = vunpack.c.l.b16 %v2833
    %v2905 = vunpack.c.l.b16 %v2834
    %v2906 = vunpack.c.l.b16 %v2835
    %v2907 = vunpack.c.l.b16 %v2836
    %v2908 = vunpack.c.l.b16 %v2837
    %v2909 = vunpack.c.l.b16 %v2838
    %v2910 = vunpack.c.l.b16 %v2839
    %v2911 = vunpack.c.l.b16 %v2840
    %v2912 = vunpack.c.l.b16 %v2841
    %v2913 = vunpack.c.l.b16 %v2842
    %v2914 = vunpack.c.l.b16 %v2843
    %v2915 = vunpack.c.l.b16 %v2844
    %v2916 = vunpack.c.l.b16 %v2845
    %v2917 = vunpack.c.l.b16 %v2846
    %v2918 = vunpack.c.l.b16 %v2847
    %v2919 = vunpack.c.l.b16 %v2848
    %v2920 = vunpack.c.l.b16 %v2849
    %v2921 = vunpack.c.l.b16 %v2850
    %v2922 = vunpack.c.l.b16 %v2851
    %v2923 = vunpack.c.l.b16 %v2852
    %v2924 = vpack.c.b16 %v2893, %v2892
    %v2925 = vpack.c.b16 %v2895, %v2894
    %v2926 = vpack.c.b16 %v2897, %v2896
    %v2927 = vpack.c.b16 %v2899, %v2898
    %v2928 = vpack.c.b16 %v2901, %v2900
    %v2929 = vpack.c.b16 %v2903, %v2902
    %v2930 = vpack.c.b16 %v2905, %v2904
    %v2931 = vpack.c.b16 %v2907, %v2906
    %v2932 = vpack.c.b16 %v2909, %v2908
    %v2933 = vpack.c.b16 %v2911, %v2910
    %v2934 = vpack.c.b16 %v2913, %v2912
    %v2935 = vpack.c.b16 %v2915, %v2914
    %v2936 = vpack.c.b16 %v2917, %v2916
    %v2937 = vpack.c.b16 %v2919, %v2918
    %v2938 = vpack.c.b16 %v2921, %v2920
    %v2939 = vpack.c.b16 %v2923, %v2922
    %2956 = vmatprep.subr.bf16.mxu0 0
    %2957 = vmatpush1.bf16.msra.mxu0 %v2924
    %2958 = vmatprep.subr.bf16.mxu0 0
    %2959 = vmatpush1.bf16.msra.mxu0 %v2925
    %2960 = vmatprep.subr.bf16.mxu0 0
    %2961 = vmatpush1.bf16.msra.mxu0 %v2926
    %2962 = vmatprep.subr.bf16.mxu0 0
    %2963 = vmatpush1.bf16.msra.mxu0 %v2927
    %2964 = vmatprep.subr.bf16.mxu0 0
    %2965 = vmatpush1.bf16.msra.mxu0 %v2928
    %2966 = vmatprep.subr.bf16.mxu0 0
    %2967 = vmatpush1.bf16.msra.mxu0 %v2929
    %2968 = vmatprep.subr.bf16.mxu0 0
    %2969 = vmatpush1.bf16.msra.mxu0 %v2930
    %2970 = vmatprep.subr.bf16.mxu0 0
    %2971 = vmatpush1.bf16.msra.mxu0 %v2931
    %2972 = vmatprep.subr.bf16.mxu0 0
    %2973 = vmatpush1.bf16.msra.mxu0 %v2932
    %2974 = vmatprep.subr.bf16.mxu0 0
    %2975 = vmatpush1.bf16.msra.mxu0 %v2933
    %2976 = vmatprep.subr.bf16.mxu0 0
    %2977 = vmatpush1.bf16.msra.mxu0 %v2934
    %2978 = vmatprep.subr.bf16.mxu0 0
    %2979 = vmatpush1.bf16.msra.mxu0 %v2935
    %2980 = vmatprep.subr.bf16.mxu0 0
    %2981 = vmatpush1.bf16.msra.mxu0 %v2936
    %2982 = vmatprep.subr.bf16.mxu0 0
    %2983 = vmatpush1.bf16.msra.mxu0 %v2937
    %2984 = vmatprep.subr.bf16.mxu0 0
    %2985 = vmatpush1.bf16.msra.mxu0 %v2938
    %2986 = vmatprep.subr.bf16.mxu0 0
    %2987 = vmatpush1.bf16.msra.mxu0 %v2939
    %2988 = vmatprep.mubr.bf16.mxu0 %v2820
    %2989 = vmatmul.mubr.bf16.gmra.mrb[0].mxu0 %v2819
    %v2990 = vpop.f32.mrb[0].mxu0
    %v2991 = vadd.f32 %v2858, %v2990
    %v2992 = vpop.f32.mrb[0].mxu0
    %v2993 = vpop.f32.mrb[0].mxu0
    %v2994 = vpop.f32.mrb[0].mxu0
    %2995 = vdwg.mxu0
    %v2996 = vmul.f32 %v2991, 0.01
    %v2997 = vmax.f32 %v2991, %v2996
    %v2998 = vld [vmem:[%s9] sm:$0x1]
    %v2999 = vunpack.c.l.bf16 %v2998
    %v3000 = vlaneseq
    %v3001 = vshrl.u32 %v3000, 7
    %v3002 = vsub.s32 0, %v3001
    %v3003 = vrot.slane %v2999, %v3002
    %v3004 = vmul.f32 %v2997, %v3003
    %3005 = vadd.xlane.f32.xlu0 %v3004
    %v3006 = vpop.xlane.xlu0 %3005
    %v3007 = vld [vmem:[#allocation2] sm:$0x1]
    %v3009 = vlaneseq
    %v3010 = vshrl.u32 %v3009, 7
    %v3011 = vsub.s32 0, %v3010
    %v3012 = vrot.slane %v3007, %v3011
    %v3014 = vadd.f32 %v3006, %v3012
    %vm3015 = vcmask 7168
    %3016 = vst.msk [vmem:[%s11] sm:$0xff] %vm3015, %v3014
    // Predicated region
    $region66: #{tpu_custom_call.1} parent=1 // pred_check
      _
    $region67: #{tpu_custom_call.1} parent=1 // pred_check_branch
      %3018 = sbr.rel (0) target = $region69
    $region68: #{tpu_custom_call.1} parent=1 // pred_region
      _
    $region69: #{tpu_custom_call.1} parent=1 // pred_fallthru
      _
    // Predicated region
    $region70: #{tpu_custom_call.1} parent=1 // pred_check
      _
    $region71: #{tpu_custom_call.1} parent=1 // pred_check_branch
      %3020 = sbr.rel (0) target = $region73
    $region72: #{tpu_custom_call.1} parent=1 // pred_region
      _
    $region73: #{tpu_custom_call.1} parent=1 // pred_fallthru
      _
    %3021 = vsyncpa [#allocation4], 1
    %3022 = vsyncpa [#allocation6], 1
    %3023 = vsyncpa [#allocation9], 1

</llo_original>
